<compile_context>
chip_gen: v5e
topology: v5e:2x2
jax: 0.10.0
libtpu: 0.0.40
codegen_flags: <defaults>
</compile_context>

<pallas_src>
import jax
import jax.numpy as jnp
import numpy as np
from jax.experimental import pallas as pl
from jax.experimental.pallas import tpu as pltpu

_VMEM_LIMIT = 32 * 1024 * 1024   # explicit scoped-VMEM limit (safe on all gens)


# ---------------------------------------------------------------------------
# Kernel A: bilinear 2x upsample (align_corners=True) of x1, placed/zero-padded
# to x2's spatial size, concat [x2, up(x1)] on channels, emitted as a
# W-zero-padded NHWC buffer (columns 0 and W+1 zero) so the conv stage needs
# no wrapper-side padding at all.  The F.pad diff placement is folded into the
# precomputed interpolation matrices; the interpolation itself is two small
# MXU matmuls.
# ---------------------------------------------------------------------------
def _upsample_concat_kernel(x1_ref, x2_ref, wh_ref, wwt_ref, o_ref):
    _, H1, W1, C1 = x1_ref.shape
    _, H2, W2, C2 = x2_ref.shape
    C = C1 + C2

    x1 = x1_ref[0]                                          # (H1, W1, C1)

    # Row interpolation: (H2, H1) @ (H1, W1*C1) on the MXU.
    t = jnp.dot(wh_ref[...], x1.reshape(H1, W1 * C1),
                preferred_element_type=jnp.float32)         # (H2, W1*C1)
    t = t.reshape(H2, W1, C1)

    # Column interpolation: put W on lanes, (H2*C1, W1) @ (W1, W2), C back.
    t = jnp.transpose(t, (0, 2, 1)).reshape(H2 * C1, W1)
    u = jnp.dot(t, wwt_ref[...],
                preferred_element_type=jnp.float32)         # (H2*C1, W2)
    u = jnp.transpose(u.reshape(H2, C1, W2), (0, 2, 1))     # (H2, W2, C1)

    # torch.cat([x2, up(x1)], dim=channel), then zero W border, one dense store.
    cat = jnp.concatenate([x2_ref[0].astype(jnp.float32), u], axis=-1)
    zcol = jnp.zeros((H2, 1, C), jnp.float32)
    full = jnp.concatenate([zcol, cat, zcol], axis=1)       # (H2, W2+2, C)
    o_ref[0] = full.astype(o_ref.dtype)


def _interp_matrix(out_total, in_size, up_size, offset):
    """Rows [offset, offset+up_size) hold align_corners=True bilinear weights
    for 2x upsampling; all other rows are zero (the F.pad region)."""
    m = np.zeros((out_total, in_size), np.float32)
    for o in range(up_size):
        src = o * (in_size - 1) / (up_size - 1) if up_size > 1 else 0.0
        lo = int(np.floor(src))
        hi = min(lo + 1, in_size - 1)
        a = src - lo
        m[offset + o, lo] += 1.0 - a
        m[offset + o, hi] += a
    return jnp.asarray(m)


def upsample_concat_pad(x1_nhwc, x2_nhwc):
    N, H1, W1, C1 = x1_nhwc.shape
    N2, H2, W2, C2 = x2_nhwc.shape
    assert N == N2
    dY, dX = H2 - 2 * H1, W2 - 2 * W1
    # TODO(synk): negative diff (cropping the upsampled map) is not supported.
    assert dY >= 0 and dX >= 0
    wh = _interp_matrix(H2, H1, 2 * H1, dY // 2)            # (H2, H1)
    wwt = _interp_matrix(W2, W1, 2 * W1, dX // 2).T         # (W1, W2)
    C = C1 + C2
    return pl.pallas_call(
        _upsample_concat_kernel,
        out_shape=jax.ShapeDtypeStruct((N, H2, W2 + 2, C), x2_nhwc.dtype),
        grid=(N,),
        in_specs=[
            pl.BlockSpec((1, H1, W1, C1), lambda n: (n, 0, 0, 0)),
            pl.BlockSpec((1, H2, W2, C2), lambda n: (n, 0, 0, 0)),
            pl.BlockSpec((H2, H1), lambda n: (0, 0)),
            pl.BlockSpec((W1, W2), lambda n: (0, 0)),
        ],
        out_specs=pl.BlockSpec((1, H2, W2 + 2, C), lambda n: (n, 0, 0, 0)),
        compiler_params=pltpu.CompilerParams(
            dimension_semantics=("parallel",),
            vmem_limit_bytes=_VMEM_LIMIT),
    )(x1_nhwc, x2_nhwc, wh, wwt)


# ---------------------------------------------------------------------------
# Kernel B: fused DoubleConv.  Both 3x3 "same" convs (BN scale folded into the
# weights, BN shift added in-kernel, ReLU) run on one row block; the mid
# activation lives entirely in VMEM/vregs.  Tiled over (N, H-row blocks); the
# 2-row H halo comes from pl.when-guarded async DMAs into a VMEM slab (zero
# rows at image edges); the W halo is already baked into the zero-padded input
# columns.  One im2col MXU matmul per conv stage per row block.
# ---------------------------------------------------------------------------
def _double_conv_kernel(x_hbm, w1_ref, b1_ref, w2_ref, b2_ref, o_ref,
                        xbuf, sem):
    n = pl.program_id(0)
    i = pl.program_id(1)
    nh = pl.num_programs(1)
    th = xbuf.shape[0] - 4
    Wp = xbuf.shape[1]
    Cin = xbuf.shape[2]
    W = Wp - 2
    Cmid = w1_ref.shape[1]
    Cout = o_ref.shape[-1]
    H = nh * th
    row0 = pl.multiple_of(i * th, th)

    # Main rows [row0, row0+th) -> xbuf rows [2, 2+th).
    mid_cp = pltpu.make_async_copy(x_hbm.at[n, pl.ds(row0, th)],
                                   xbuf.at[pl.ds(2, th)], sem.at[0])
    mid_cp.start()

    # Top / bottom 2-row halos: copy neighbour rows, or zero at image edges.
    @pl.when(i > 0)
    def _():
        pltpu.make_async_copy(x_hbm.at[n, pl.ds(row0 - 2, 2)],
                              xbuf.at[pl.ds(0, 2)], sem.at[1]).start()

    @pl.when(i == 0)
    def _():
        xbuf[0:2] = jnp.zeros((2, Wp, Cin), xbuf.dtype)

    @pl.when(i < nh - 1)
    def _():
        pltpu.make_async_copy(x_hbm.at[n, pl.ds(row0 + th, 2)],
                              xbuf.at[pl.ds(th + 2, 2)], sem.at[2]).start()

    @pl.when(i == nh - 1)
    def _():
        xbuf[th + 2:th + 4] = jnp.zeros((2, Wp, Cin), xbuf.dtype)

    mid_cp.wait()

    @pl.when(i > 0)
    def _():
        pltpu.make_async_copy(x_hbm.at[n, pl.ds(row0 - 2, 2)],
                              xbuf.at[pl.ds(0, 2)], sem.at[1]).wait()

    @pl.when(i < nh - 1)
    def _():
        pltpu.make_async_copy(x_hbm.at[n, pl.ds(row0 + th, 2)],
                              xbuf.at[pl.ds(th + 2, 2)], sem.at[2]).wait()

    xs = xbuf[...]                                          # (th+4, Wp, Cin)

    # --- conv1 + BN shift + ReLU: produces th+2 mid rows (1-row halo) -------
    patches1 = jnp.concatenate(
        [xs[kh:kh + th + 2, kw:kw + W, :]
         for kh in range(3) for kw in range(3)], axis=-1)   # (th+2, W, 9*Cin)
    m = jnp.dot(patches1.reshape((th + 2) * W, 9 * Cin), w1_ref[...],
                preferred_element_type=jnp.float32)         # ((th+2)*W, Cmid)
    m = jnp.maximum(m + b1_ref[...], 0.0).reshape(th + 2, W, Cmid)

    # Mid rows outside the image must be ZERO padding for conv2, not conv1 of
    # zeros (which would be relu(shift1) != 0).
    ridx = jax.lax.broadcasted_iota(jnp.int32, (th + 2, 1, 1), 0)
    src_row = row0 - 1 + ridx
    m = jnp.where((src_row >= 0) & (src_row < H), m, 0.0)

    zcol = jnp.zeros((th + 2, 1, Cmid), jnp.float32)
    mp = jnp.concatenate([zcol, m, zcol], axis=1)           # (th+2, Wp, Cmid)

    # --- conv2 + BN shift + ReLU: produces the th output rows ---------------
    patches2 = jnp.concatenate(
        [mp[kh:kh + th, kw:kw + W, :]
         for kh in range(3) for kw in range(3)], axis=-1)   # (th, W, 9*Cmid)
    acc = jnp.dot(patches2.reshape(th * W, 9 * Cmid), w2_ref[...],
                  preferred_element_type=jnp.float32)       # (th*W, Cout)
    y = jnp.maximum(acc + b2_ref[...], 0.0)
    o_ref[0] = y.reshape(th, W, Cout).astype(o_ref.dtype)


def _pick_block_rows(H, Wp, Cin, Cmid, Cout, budget_bytes=8 * 1024 * 1024):
    """Largest valid divisor of H whose per-step working set fits the budget.

    Validity: th == H, or th >= 2 (so the 2-row halo never underflows)."""
    W = Wp - 2
    candidates = [t for t in range(1, H + 1)
                  if H % t == 0 and (t >= 2 or t == H)]
    best = None
    for th in candidates:
        need = 4 * ((th + 4) * Wp * Cin            # input slab scratch
                    + (th + 2) * W * 9 * Cin       # conv1 im2col patches
                    + (th + 2) * Wp * Cmid         # mid activation (padded)
                    + th * W * 9 * Cmid            # conv2 im2col patches
                    + 2 * th * W * Cout            # double-buffered output
                    + 9 * Cin * Cmid + 9 * Cmid * Cout + Cmid + Cout)
        if need <= budget_bytes:
            best = th
    if best is None:
        best = candidates[0]   # smallest valid block; may exceed the budget
    return best


def double_conv_bn_relu(x_wpad, w1_flat, b1_row, w2_flat, b2_row, *,
                        block_rows=None):
    """x_wpad: (N, H, W+2, Cin), zero columns at 0 and W+1.
    w*_flat: (9*C, C') with eval-mode BN scale folded in.  b*_row: (1, C')."""
    N, H, Wp, Cin = x_wpad.shape
    W = Wp - 2
    K9a, Cmid = w1_flat.shape
    K9b, Cout = w2_flat.shape
    assert K9a == 9 * Cin and K9b == 9 * Cmid
    th = block_rows if block_rows is not None else _pick_block_rows(
        H, Wp, Cin, Cmid, Cout)
    assert H % th == 0 and (th >= 2 or th == H), (H, th)
    nh = H // th

    return pl.pallas_call(
        _double_conv_kernel,
        out_shape=jax.ShapeDtypeStruct((N, H, W, Cout), x_wpad.dtype),
        grid=(N, nh),
        in_specs=[
            pl.BlockSpec(memory_space=pl.ANY),                 # activation HBM
            pl.BlockSpec((K9a, Cmid), lambda n, i: (0, 0)),    # weights stay
            pl.BlockSpec((1, Cmid), lambda n, i: (0, 0)),      # resident in
            pl.BlockSpec((K9b, Cout), lambda n, i: (0, 0)),    # VMEM
            pl.BlockSpec((1, Cout), lambda n, i: (0, 0)),
        ],
        out_specs=pl.BlockSpec((1, th, W, Cout), lambda n, i: (n, i, 0, 0)),
        scratch_shapes=[
            pltpu.VMEM((th + 4, Wp, Cin), x_wpad.dtype),
            pltpu.SemaphoreType.DMA((3,)),
        ],
        compiler_params=pltpu.CompilerParams(
            dimension_semantics=("parallel", "parallel"),
            vmem_limit_bytes=_VMEM_LIMIT),
    )(x_wpad, w1_flat, b1_row, w2_flat, b2_row)


# ---------------------------------------------------------------------------
# Wrappers / parameters / reference
# ---------------------------------------------------------------------------
def _fold_bn_into_weights(w_hwio, scale):
    kh, kw, ci, co = w_hwio.shape
    wf = (w_hwio * scale[None, None, None, :]).astype(jnp.float32)
    return wf.reshape(kh * kw * ci, co)


def up_forward(x1_nchw, x2_nchw, params, *, block_rows=None):
    """Up_w_options.forward (bilinear=True, relu, batch-norm eval mode)."""
    x1 = jnp.transpose(x1_nchw, (0, 2, 3, 1))      # NCHW -> NHWC
    x2 = jnp.transpose(x2_nchw, (0, 2, 3, 1))
    x = upsample_concat_pad(x1, x2)                # (N, H2, W2+2, C1+C2)
    (w1, s1, b1), (w2, s2, b2) = params
    y = double_conv_bn_relu(
        x,
        _fold_bn_into_weights(w1, s1), b1.reshape(1, -1).astype(jnp.float32),
        _fold_bn_into_weights(w2, s2), b2.reshape(1, -1).astype(jnp.float32),
        block_rows=block_rows)
    return jnp.transpose(y, (0, 3, 1, 2))          # NHWC -> NCHW


def init_up_params(key, in_channels, out_channels):
    """Conv/BN params for DoubleConv(in, out, mid=in//2), eval-mode BN."""
    mid_channels = in_channels // 2
    eps = 1e-5
    params = []
    cin = in_channels
    for cout in (mid_channels, out_channels):
        key, k1, k2, k3, k4, k5 = jax.random.split(key, 6)
        fan_in = cin * 9
        w_oihw = jax.random.normal(k1, (cout, cin, 3, 3),
                                   jnp.float32) / jnp.sqrt(fan_in)
        w_hwio = jnp.transpose(w_oihw, (2, 3, 1, 0))
        gamma = 1.0 + 0.1 * jax.random.normal(k2, (cout,), jnp.float32)
        beta = 0.1 * jax.random.normal(k3, (cout,), jnp.float32)
        r_mean = 0.1 * jax.random.normal(k4, (cout,), jnp.float32)
        r_var = jnp.abs(jax.random.normal(k5, (cout,), jnp.float32)) + 0.5
        scale = gamma / jnp.sqrt(r_var + eps)
        shift = beta - r_mean * scale
        params.append((w_hwio, scale, shift))
        cin = cout
    return params


def _ref_bilinear_up(x_nhwc, Hout, Wout):
    N, H, W, C = x_nhwc.shape
    hs = jnp.arange(Hout, dtype=jnp.float32) * (H - 1) / max(Hout - 1, 1)
    h0 = jnp.floor(hs).astype(jnp.int32)
    h1 = jnp.minimum(h0 + 1, H - 1)
    ah = (hs - h0.astype(jnp.float32))[None, :, None, None]
    ws = jnp.arange(Wout, dtype=jnp.float32) * (W - 1) / max(Wout - 1, 1)
    w0 = jnp.floor(ws).astype(jnp.int32)
    w1 = jnp.minimum(w0 + 1, W - 1)
    aw = (ws - w0.astype(jnp.float32))[None, None, :, None]
    xh = x_nhwc[:, h0] * (1.0 - ah) + x_nhwc[:, h1] * ah
    return xh[:, :, w0] * (1.0 - aw) + xh[:, :, w1] * aw


def reference_forward(x1_nchw, x2_nchw, params):
    x1 = jnp.transpose(x1_nchw, (0, 2, 3, 1))
    x2 = jnp.transpose(x2_nchw, (0, 2, 3, 1))
    _, H1, W1, _ = x1.shape
    _, H2, W2, _ = x2.shape
    up = _ref_bilinear_up(x1, 2 * H1, 2 * W1)
    dY, dX = H2 - 2 * H1, W2 - 2 * W1
    up = jnp.pad(up, ((0, 0), (dY // 2, dY - dY // 2),
                      (dX // 2, dX - dX // 2), (0, 0)))
    x = jnp.concatenate([x2, up], axis=-1)
    for (w_hwio, scale, shift) in params:
        x = jax.lax.conv_general_dilated(
            x, w_hwio, (1, 1), 'SAME',
            dimension_numbers=('NHWC', 'HWIO', 'NHWC'))
        x = x * scale + shift
        x = jnp.maximum(x, 0.0)
    return jnp.transpose(x, (0, 3, 1, 2))


if __name__ == "__main__":
    key = jax.random.PRNGKey(0)
    k1, k2, kp = jax.random.split(key, 3)

    # x1: low-res decoder features (to be upsampled), x2: encoder skip.
    N, C1, H1, W1 = 2, 8, 8, 8
    C2, H2, W2 = 8, 16, 16
    in_channels = C1 + C2          # channels after torch.cat([x2, up(x1)])
    out_channels = 16

    x1 = jax.random.normal(k1, (N, C1, H1, W1), jnp.float32)   # NCHW
    x2 = jax.random.normal(k2, (N, C2, H2, W2), jnp.float32)   # NCHW
    params = init_up_params(kp, in_channels, out_channels)

    # block_rows=8 -> 2 row blocks per image: exercises both the zero-edge and
    # the copy-halo paths of the guarded 2-row H-halo DMA.
    out = jax.block_until_ready(up_forward(x1, x2, params, block_rows=8))
    ref = jax.block_until_ready(reference_forward(x1, x2, params))

    assert out.shape == (N, out_channels, H2, W2), out.shape
    err = float(jnp.max(jnp.abs(out - ref)))
    assert jnp.allclose(out, ref, atol=1e-4, rtol=1e-4), err

    print("KERNEL_OK")
</pallas_src>

<mosaic_0001>
module attributes {stable_mosaic.version = 11 : i64} {
  func.func @_upsample_concat_kernel(%arg0: i32, %arg1: memref<1x8x8x8xf32, #tpu.memory_space<vmem>>, %arg2: memref<1x16x16x8xf32, #tpu.memory_space<vmem>>, %arg3: memref<16x8xf32, #tpu.memory_space<vmem>>, %arg4: memref<8x16xf32, #tpu.memory_space<vmem>>, %arg5: memref<1x16x18x16xf32, #tpu.memory_space<vmem>>) attributes {dimension_semantics = [#tpu.dimension_semantics<parallel>], iteration_bounds = array<i64: 2>, scalar_prefetch = 0 : i64, scratch_operands = 0 : i64, tpu.core_type = #tpu.core_type<tc>, window_params = [{transform_indices = @transform_0, window_bounds = array<i64: 1, 8, 8, 8>}, {transform_indices = @transform_1, window_bounds = array<i64: 1, 16, 16, 8>}, {pipeline_mode = #tpu.pipeline_mode<synchronous>, transform_indices = @transform_2, window_bounds = array<i64: 16, 8>}, {pipeline_mode = #tpu.pipeline_mode<synchronous>, transform_indices = @transform_3, window_bounds = array<i64: 8, 16>}, {transform_indices = @transform_4, window_bounds = array<i64: 1, 16, 18, 16>}]} {
    %c0 = arith.constant 0 : index
    %c0_0 = arith.constant 0 : index
    %c0_1 = arith.constant 0 : index
    %c0_2 = arith.constant 0 : index
    %0 = vector.load %arg1[%c0, %c0_0, %c0_1, %c0_2] : memref<1x8x8x8xf32, #tpu.memory_space<vmem>>, vector<1x8x8x8xf32>
    %1 = vector.shape_cast %0 : vector<1x8x8x8xf32> to vector<8x8x8xf32>
    %c0_3 = arith.constant 0 : index
    %c0_4 = arith.constant 0 : index
    %2 = vector.load %arg3[%c0_3, %c0_4] : memref<16x8xf32, #tpu.memory_space<vmem>>, vector<16x8xf32>
    %3 = vector.shape_cast %1 : vector<8x8x8xf32> to vector<8x64xf32>
    %cst = arith.constant dense<0.000000e+00> : vector<16x64xf32>
    %4 = tpu.matmul %2, %3, %cst {dimension_numbers = #tpu.dot_dimension_numbers<[1], [0], [0], [1], [0, 0, 1, 1], [], []>} : vector<16x8xf32>, vector<8x64xf32>, vector<16x64xf32> -> vector<16x64xf32>
    %5 = vector.shape_cast %4 : vector<16x64xf32> to vector<16x8x8xf32>
    %6 = tpu.transpose %5, [0, 2, 1] : vector<16x8x8xf32> -> vector<16x8x8xf32>
    %7 = vector.shape_cast %6 : vector<16x8x8xf32> to vector<128x8xf32>
    %c0_5 = arith.constant 0 : index
    %c0_6 = arith.constant 0 : index
    %8 = vector.load %arg4[%c0_5, %c0_6] : memref<8x16xf32, #tpu.memory_space<vmem>>, vector<8x16xf32>
    %cst_7 = arith.constant dense<0.000000e+00> : vector<128x16xf32>
    %9 = tpu.matmul %7, %8, %cst_7 {dimension_numbers = #tpu.dot_dimension_numbers<[1], [0], [0], [1], [0, 0, 1, 1], [], []>} : vector<128x8xf32>, vector<8x16xf32>, vector<128x16xf32> -> vector<128x16xf32>
    %10 = vector.shape_cast %9 : vector<128x16xf32> to vector<16x8x16xf32>
    %11 = tpu.transpose %10, [0, 2, 1] : vector<16x8x16xf32> -> vector<16x16x8xf32>
    %c0_8 = arith.constant 0 : index
    %c0_9 = arith.constant 0 : index
    %c0_10 = arith.constant 0 : index
    %c0_11 = arith.constant 0 : index
    %12 = vector.load %arg2[%c0_8, %c0_9, %c0_10, %c0_11] : memref<1x16x16x8xf32, #tpu.memory_space<vmem>>, vector<1x16x16x8xf32>
    %13 = vector.shape_cast %12 : vector<1x16x16x8xf32> to vector<16x16x8xf32>
    %14 = tpu.concatenate %13, %11 in 2 : vector<16x16x8xf32>, vector<16x16x8xf32> -> vector<16x16x16xf32>
    %cst_12 = arith.constant 0.000000e+00 : f32
    %15 = vector.broadcast %cst_12 : f32 to vector<16x1x16xf32>
    %16 = tpu.concatenate %15, %14, %15 in 1 : vector<16x1x16xf32>, vector<16x16x16xf32>, vector<16x1x16xf32> -> vector<16x18x16xf32>
    %c0_13 = arith.constant 0 : index
    %c0_14 = arith.constant 0 : index
    %c0_15 = arith.constant 0 : index
    %c0_16 = arith.constant 0 : index
    %17 = vector.load %arg5[%c0_13, %c0_14, %c0_15, %c0_16] : memref<1x16x18x16xf32, #tpu.memory_space<vmem>>, vector<1x16x18x16xf32>
    %18 = vector.shape_cast %17 : vector<1x16x18x16xf32> to vector<16x18x16xf32>
    %19 = vector.shape_cast %16 : vector<16x18x16xf32> to vector<1x16x18x16xf32>
    tpu.vector_store %arg5[%c0_13, %c0_14, %c0_15, %c0_16], %19 {strides = array<i32>} : memref<1x16x18x16xf32, #tpu.memory_space<vmem>>, vector<1x16x18x16xf32>,
    return
  }
  func.func @transform_0(%arg0: i32) -> (i32, i32, i32, i32) {
    %c0_i32 = arith.constant 0 : i32
    %c0_i32_0 = arith.constant 0 : i32
    %c0_i32_1 = arith.constant 0 : i32
    %c0_i32_2 = arith.constant 0 : i32
    return %arg0, %c0_i32, %c0_i32_0, %c0_i32_1 : i32, i32, i32, i32
  }
  func.func @transform_1(%arg0: i32) -> (i32, i32, i32, i32) {
    %c0_i32 = arith.constant 0 : i32
    %c0_i32_0 = arith.constant 0 : i32
    %c0_i32_1 = arith.constant 0 : i32
    %c0_i32_2 = arith.constant 0 : i32
    return %arg0, %c0_i32, %c0_i32_0, %c0_i32_1 : i32, i32, i32, i32
  }
  func.func @transform_2(%arg0: i32) -> (i32, i32) {
    %c0_i32 = arith.constant 0 : i32
    %c0_i32_0 = arith.constant 0 : i32
    %c0_i32_1 = arith.constant 0 : i32
    return %c0_i32, %c0_i32_0 : i32, i32
  }
  func.func @transform_3(%arg0: i32) -> (i32, i32) {
    %c0_i32 = arith.constant 0 : i32
    %c0_i32_0 = arith.constant 0 : i32
    %c0_i32_1 = arith.constant 0 : i32
    return %c0_i32, %c0_i32_0 : i32, i32
  }
  func.func @transform_4(%arg0: i32) -> (i32, i32, i32, i32) {
    %c0_i32 = arith.constant 0 : i32
    %c0_i32_0 = arith.constant 0 : i32
    %c0_i32_1 = arith.constant 0 : i32
    %c0_i32_2 = arith.constant 0 : i32
    return %arg0, %c0_i32, %c0_i32_0, %c0_i32_1 : i32, i32, i32, i32
  }
}

</mosaic_0001>

<llo_original>
// kernel: tpu_custom_call.1
$region0: #{tpu_custom_call.1}
  #allocation0 [shape = 'u32[]', space=smem, size = 0x4, offset = 0x4, fixed_abs, tag = 'smem constant byte address 0x4 - core index']
  #allocation1 [shape = 'u32[72,128]{1,0:T(1,128)}', space=vmem, size = 0x9000, scoped, tag = 'internal scratch']
  %s0 = inlined_call_operand.vmem [shape: f32[2,8,8,8], index: 0, kind: input, shape index: {}]
  %s1 = inlined_call_operand.vmem [shape: f32[2,16,16,8], index: 1, kind: input, shape index: {}]
  %s2 = inlined_call_operand.vmem [shape: f32[16,8], index: 2, kind: input, shape index: {}]
  %s3 = inlined_call_operand.vmem [shape: f32[8,16], index: 3, kind: input, shape index: {}]
  %s4 = inlined_call_operand.vmem [shape: f32[2,16,18,16], index: 4, kind: output, shape index: {}]
  %s5 = sld [smem:[#allocation0]]
  $region49: #{tpu_custom_call.1} parent=0
    _
  %s7 = ssub.s32 1, %s5
  %s8 = scalar_select 0, %s7, %s5
  loop: start=0, step=1, limit=4
  $region2: #{tpu_custom_call.1} parent=0 // loop_pre_header
    _
  $region3: #{tpu_custom_call.1} parent=0 // loop_header
    %s10 = sphi 0, %s14
    %p11 = scmp.ge.s32.totalorder %s10, 4
    %s20 = sphi 0, %s22
    %s23 = sphi 0, %s20
    %s24 = sphi 0, %s23
    %s40 = sphi 0, %s24
    %s46 = sphi 0, %s48
    %s49 = sphi 0, %s46
    %s50 = sphi 0, %s49
    %s66 = sphi 0, %s50
    %s70 = sphi 0, %s70
    %s72 = sphi 0, %s70
    %s73 = sphi 0, %s72
    %s87 = sphi 0, %s73
    %s91 = sphi 0, %s91
    %s93 = sphi 0, %s91
    %s94 = sphi 0, %s93
    %s108 = sphi 0, %s94
    %s114 = sphi 0, %s116
    %s117 = sphi 0, %s114
    %s118 = sphi 0, %s117
    %s134 = sphi 0, %s118
  $region4: #{tpu_custom_call.1} parent=0 // loop_header_branch
    %13 = sbr.rel (%p11) target = $region8
  $region5: #{tpu_custom_call.1} parent=0 // loop_body
    %s15 = ssub.s32 %s10, 1
    %s16 = ssub.s32 %s10, 2
    %s17 = sadd.s32 %s10, 1
    %s18 = ssub.s32 %s10, %s17
    %p19 = scmp.eq.s32.totalorder %s18, 0
    %s21 = sadd.s32 %s20, 1
    %s22 = scalar_select %p19, %s20, %s21
    %p25 = pneg %p19
    %p26 = scmp.eq.s32.totalorder %s10, 1
    %p27 = por %p25, %p26
    %p28 = scmp.ne.s32.totalorder %s20, %s23
    %p29 = scmp.eq.s32.totalorder %s10, 0
    %p30 = por %p28, %p29
    %p31 = scmp.ne.s32.totalorder %s20, %s23
    %p32 = scmp.eq.s32.totalorder %s15, 1
    %p33 = por %p31, %p32
    %p34 = scmp.ne.s32.totalorder %s23, %s24
    %p35 = scmp.eq.s32.totalorder %s15, 0
    %p36 = por %p34, %p35
    %p37 = scmp.ne.s32.totalorder %s23, %s24
    %p38 = scmp.eq.s32.totalorder %s16, 1
    %p39 = por %p37, %p38
    %p41 = scmp.ne.s32.totalorder %s24, %s40
    %p42 = scmp.eq.s32.totalorder %s16, 0
    %p43 = por %p41, %p42
    %s44 = ssub.s32 %s10, %s17
    %p45 = scmp.eq.s32.totalorder %s44, 0
    %s47 = sadd.s32 %s46, 1
    %s48 = scalar_select %p45, %s46, %s47
    %p51 = pneg %p45
    %p52 = scmp.eq.s32.totalorder %s10, 1
    %p53 = por %p51, %p52
    %p54 = scmp.ne.s32.totalorder %s46, %s49
    %p55 = scmp.eq.s32.totalorder %s10, 0
    %p56 = por %p54, %p55
    %p57 = scmp.ne.s32.totalorder %s46, %s49
    %p58 = scmp.eq.s32.totalorder %s15, 1
    %p59 = por %p57, %p58
    %p60 = scmp.ne.s32.totalorder %s49, %s50
    %p61 = scmp.eq.s32.totalorder %s15, 0
    %p62 = por %p60, %p61
    %p63 = scmp.ne.s32.totalorder %s49, %s50
    %p64 = scmp.eq.s32.totalorder %s16, 1
    %p65 = por %p63, %p64
    %p67 = scmp.ne.s32.totalorder %s50, %s66
    %p68 = scmp.eq.s32.totalorder %s16, 0
    %p69 = por %p67, %p68
    %s71 = sadd.s32 %s70, 1
    %p74 = scmp.eq.s32.totalorder %s10, 1
    %p75 = scmp.ne.s32.totalorder %s70, %s72
    %p76 = scmp.eq.s32.totalorder %s10, 0
    %p77 = por %p75, %p76
    %p78 = scmp.ne.s32.totalorder %s70, %s72
    %p79 = scmp.eq.s32.totalorder %s15, 1
    %p80 = por %p78, %p79
    %p81 = scmp.ne.s32.totalorder %s72, %s73
    %p82 = scmp.eq.s32.totalorder %s15, 0
    %p83 = por %p81, %p82
    %p84 = scmp.ne.s32.totalorder %s72, %s73
    %p85 = scmp.eq.s32.totalorder %s16, 1
    %p86 = por %p84, %p85
    %p88 = scmp.ne.s32.totalorder %s73, %s87
    %p89 = scmp.eq.s32.totalorder %s16, 0
    %p90 = por %p88, %p89
    %s92 = sadd.s32 %s91, 1
    %p95 = scmp.eq.s32.totalorder %s10, 1
    %p96 = scmp.ne.s32.totalorder %s91, %s93
    %p97 = scmp.eq.s32.totalorder %s10, 0
    %p98 = por %p96, %p97
    %p99 = scmp.ne.s32.totalorder %s91, %s93
    %p100 = scmp.eq.s32.totalorder %s15, 1
    %p101 = por %p99, %p100
    %p102 = scmp.ne.s32.totalorder %s93, %s94
    %p103 = scmp.eq.s32.totalorder %s15, 0
    %p104 = por %p102, %p103
    %p105 = scmp.ne.s32.totalorder %s93, %s94
    %p106 = scmp.eq.s32.totalorder %s16, 1
    %p107 = por %p105, %p106
    %p109 = scmp.ne.s32.totalorder %s94, %s108
    %p110 = scmp.eq.s32.totalorder %s16, 0
    %p111 = por %p109, %p110
    %s112 = ssub.s32 %s10, %s17
    %p113 = scmp.eq.s32.totalorder %s112, 0
    %s115 = sadd.s32 %s114, 1
    %s116 = scalar_select %p113, %s114, %s115
    %p119 = pneg %p113
    %p120 = scmp.eq.s32.totalorder %s10, 1
    %p121 = por %p119, %p120
    %p122 = scmp.ne.s32.totalorder %s114, %s117
    %p123 = scmp.eq.s32.totalorder %s10, 0
    %p124 = por %p122, %p123
    %p125 = scmp.ne.s32.totalorder %s114, %s117
    %p126 = scmp.eq.s32.totalorder %s15, 1
    %p127 = por %p125, %p126
    %p128 = scmp.ne.s32.totalorder %s117, %s118
    %p129 = scmp.eq.s32.totalorder %s15, 0
    %p130 = por %p128, %p129
    %p131 = scmp.ne.s32.totalorder %s117, %s118
    %p132 = scmp.eq.s32.totalorder %s16, 1
    %p133 = por %p131, %p132
    %p135 = scmp.ne.s32.totalorder %s118, %s134
    %p136 = scmp.eq.s32.totalorder %s16, 0
    %p137 = por %p135, %p136
    %p138 = scmp.le.s32.totalorder 1, %s10
    %p139 = scmp.lt.s32.totalorder %s10, 3
    %p140 = pnand %p138, %p139
    %p141 = pneg %p140
    // Predicated region
    $region9: #{tpu_custom_call.1} parent=5 // pred_check
      _
    $region10: #{tpu_custom_call.1} parent=5 // pred_check_branch
      %143 = sbr.rel (%p140) target = $region12
    $region11: #{tpu_custom_call.1} parent=5 // pred_region
      %s144 = ssub.s32 %s10, 1
      // Predicated region
      $region13: #{tpu_custom_call.1} parent=11 // pred_check
        %p145 = pneg %p83
      $region14: #{tpu_custom_call.1} parent=11 // pred_check_branch
        %147 = sbr.rel (%p145) target = $region16
      $region15: #{tpu_custom_call.1} parent=11 // pred_region
        _
      $region16: #{tpu_custom_call.1} parent=11 // pred_fallthru
        _
      // Predicated region
      $region17: #{tpu_custom_call.1} parent=11 // pred_check
        %p148 = pneg %p104
      $region18: #{tpu_custom_call.1} parent=11 // pred_check_branch
        %150 = sbr.rel (%p148) target = $region20
      $region19: #{tpu_custom_call.1} parent=11 // pred_region
        _
      $region20: #{tpu_custom_call.1} parent=11 // pred_fallthru
        _
    $region12: #{tpu_custom_call.1} parent=5 // pred_fallthru
      _
    %p151 = scmp.lt.s32.totalorder %s10, 2
    // Predicated region
    $region21: #{tpu_custom_call.1} parent=5 // pred_check
      %p152 = pneg %p151
    $region22: #{tpu_custom_call.1} parent=5 // pred_check_branch
      %154 = sbr.rel (%p152) target = $region24
    $region23: #{tpu_custom_call.1} parent=5 // pred_region
      // Predicated region
      $region25: #{tpu_custom_call.1} parent=23 // pred_check
        %p155 = pneg %p30
      $region26: #{tpu_custom_call.1} parent=23 // pred_check_branch
        %157 = sbr.rel (%p155) target = $region28
      $region27: #{tpu_custom_call.1} parent=23 // pred_region
        %p158 = scmp.lt.s32.totalorder %s10, 1
        %s159 = scalar_select %p158, %s10, 1
        %s160 = smul.addr %s159, 8
        %s161 = smul.addr %s160, 8
        %s162 = scalar_lea.vmem %s0, %s161
      $region28: #{tpu_custom_call.1} parent=23 // pred_fallthru
        _
      // Predicated region
      $region29: #{tpu_custom_call.1} parent=23 // pred_check
        %p163 = pneg %p56
      $region30: #{tpu_custom_call.1} parent=23 // pred_check_branch
        %165 = sbr.rel (%p163) target = $region32
      $region31: #{tpu_custom_call.1} parent=23 // pred_region
        %p166 = scmp.lt.s32.totalorder %s10, 1
        %s167 = scalar_select %p166, %s10, 1
        %s168 = smul.addr %s167, 32
        %s169 = smul.addr %s168, 8
        %s170 = scalar_lea.vmem %s1, %s169
      $region32: #{tpu_custom_call.1} parent=23 // pred_fallthru
        _
    $region24: #{tpu_custom_call.1} parent=5 // pred_fallthru
      _
    %p171 = scmp.le.s32.totalorder 1, %s10
    %p172 = scmp.lt.s32.totalorder %s10, 3
    %p173 = pnand %p171, %p172
    %p174 = pneg %p173
    // Predicated region
    $region33: #{tpu_custom_call.1} parent=5 // pred_check
      _
    $region34: #{tpu_custom_call.1} parent=5 // pred_check_branch
      %176 = sbr.rel (%p173) target = $region36
    $region35: #{tpu_custom_call.1} parent=5 // pred_region
      %s177 = ssub.s32 %s10, 1
      %p178 = scmp.lt.s32.totalorder %s15, 1
      %s179 = scalar_select %p178, %s15, 1
      %s180 = smul.addr %s179, 8
      %s181 = smul.addr %s180, 8
      %s182 = scalar_lea.vmem %s0, %s181
      %p183 = pneg %p36
      %p184 = pneg %p33
      %p185 = scmp.lt.s32.totalorder %s15, 1
      %s186 = scalar_select %p185, %s15, 1
      %s187 = smul.addr %s186, 32
      %s188 = smul.addr %s187, 8
      %s189 = scalar_lea.vmem %s1, %s188
      %p190 = pneg %p62
      %p191 = pneg %p59
      %p192 = pneg %p83
      %p193 = pneg %p80
      %p194 = pneg %p104
      %p195 = pneg %p101
      %p196 = pneg %p130
      %p197 = pneg %p127
      %p198 = scmp.lt.s32.totalorder %s15, 1
      %s199 = scalar_select %p198, %s15, 1
      %s200 = smul.addr %s199, 48
      %s201 = smul.addr %s200, 8
      %s202 = scalar_lea.vmem %s4, %s201
      %p203 = scmp.lt.s32.totalorder %s15, 1
      %s204 = scalar_select %p203, %s15, 1
      %s205 = smul.addr %s204, 8
      %s206 = smul.addr %s205, 8
      %s207 = scalar_lea.vmem %s0, %s206
      %p208 = scmp.lt.s32.totalorder %s15, 1
      %s209 = scalar_select %p208, %s15, 1
      %s210 = smul.addr %s209, 32
      %s211 = smul.addr %s210, 8
      %s212 = scalar_lea.vmem %s1, %s211
      %p213 = scmp.lt.s32.totalorder %s15, 1
      %s214 = scalar_select %p213, %s15, 1
      %s215 = smul.addr %s214, 48
      %s216 = smul.addr %s215, 8
      %s217 = scalar_lea.vmem %s4, %s216
      %v218 = vld [vmem:[%s207] sm:$0xff]
      %v219 = vld [vmem:[%s207 + $0x8] sm:$0xff]
      %v220 = vld [vmem:[%s207 + $0x10] sm:$0xff]
      %v221 = vld [vmem:[%s207 + $0x18] sm:$0xff]
      %v222 = vld [vmem:[%s207 + $0x20] sm:$0xff]
      %v223 = vld [vmem:[%s207 + $0x28] sm:$0xff]
      %v224 = vld [vmem:[%s207 + $0x30] sm:$0xff]
      %v225 = vld [vmem:[%s207 + $0x38] sm:$0xff]
      %v226 = vld [vmem:[%s2] sm:$0xff]
      %v227 = vld [vmem:[%s2 + $0x8] sm:$0xff]
      %v228 = vrot.slane %v220, 4
      %vm229 = vcmask 1047556
      %v230 = vsel %vm229, %v228, %v218
      %v231 = vrot.slane %v218, 4
      %v232 = vsel %vm229, %v220, %v231
      %v234 = vunpack.c.l.s4 1983009808
      %v235 = vunpack.c.0.s8 %v234
      %v236 = vperm.slane %v230, %v235
      %v238 = vunpack.c.l.s4 1983009808
      %v239 = vunpack.c.0.s8 %v238
      %v240 = vperm.slane %v232, %v239
      %v241 = vrot.slane %v221, 4
      %v242 = vsel %vm229, %v241, %v219
      %v243 = vrot.slane %v219, 4
      %v244 = vsel %vm229, %v221, %v243
      %v246 = vunpack.c.l.s4 1983009808
      %v247 = vunpack.c.0.s8 %v246
      %v248 = vperm.slane %v242, %v247
      %v250 = vunpack.c.l.s4 1983009808
      %v251 = vunpack.c.0.s8 %v250
      %v252 = vperm.slane %v244, %v251
      %v253 = vrot.slane %v224, 4
      %v254 = vsel %vm229, %v253, %v222
      %v255 = vrot.slane %v222, 4
      %v256 = vsel %vm229, %v224, %v255
      %v258 = vunpack.c.l.s4 1983009808
      %v259 = vunpack.c.0.s8 %v258
      %v260 = vperm.slane %v254, %v259
      %v262 = vunpack.c.l.s4 1983009808
      %v263 = vunpack.c.0.s8 %v262
      %v264 = vperm.slane %v256, %v263
      %v265 = vrot.slane %v225, 4
      %v266 = vsel %vm229, %v265, %v223
      %v267 = vrot.slane %v223, 4
      %v268 = vsel %vm229, %v225, %v267
      %v270 = vunpack.c.l.s4 1983009808
      %v271 = vunpack.c.0.s8 %v270
      %v272 = vperm.slane %v266, %v271
      %v274 = vunpack.c.l.s4 1983009808
      %v275 = vunpack.c.0.s8 %v274
      %v276 = vperm.slane %v268, %v275
      %v277 = vrot.slane %v248, 4
      %v278 = vsel %vm229, %v277, %v236
      %v279 = vrot.slane %v236, 4
      %v280 = vsel %vm229, %v248, %v279
      %v282 = vunpack.c.l.s4 1934713408
      %v283 = vunpack.c.0.s8 %v282
      %v284 = vperm.slane %v278, %v283
      %v286 = vunpack.c.l.s4 1934713408
      %v287 = vunpack.c.0.s8 %v286
      %v288 = vperm.slane %v280, %v287
      %v289 = vrot.slane %v252, 4
      %v290 = vsel %vm229, %v289, %v240
      %v291 = vrot.slane %v240, 4
      %v292 = vsel %vm229, %v252, %v291
      %v294 = vunpack.c.l.s4 1934713408
      %v295 = vunpack.c.0.s8 %v294
      %v296 = vperm.slane %v290, %v295
      %v298 = vunpack.c.l.s4 1934713408
      %v299 = vunpack.c.0.s8 %v298
      %v300 = vperm.slane %v292, %v299
      %v301 = vrot.slane %v272, 4
      %v302 = vsel %vm229, %v301, %v260
      %v303 = vrot.slane %v260, 4
      %v304 = vsel %vm229, %v272, %v303
      %v306 = vunpack.c.l.s4 1934713408
      %v307 = vunpack.c.0.s8 %v306
      %v308 = vperm.slane %v302, %v307
      %v310 = vunpack.c.l.s4 1934713408
      %v311 = vunpack.c.0.s8 %v310
      %v312 = vperm.slane %v304, %v311
      %v313 = vrot.slane %v276, 4
      %v314 = vsel %vm229, %v313, %v264
      %v315 = vrot.slane %v264, 4
      %v316 = vsel %vm229, %v276, %v315
      %v318 = vunpack.c.l.s4 1934713408
      %v319 = vunpack.c.0.s8 %v318
      %v320 = vperm.slane %v314, %v319
      %v322 = vunpack.c.l.s4 1934713408
      %v323 = vunpack.c.0.s8 %v322
      %v324 = vperm.slane %v316, %v323
      %v325 = vrot.slane %v308, 4
      %v326 = vsel %vm229, %v325, %v284
      %v327 = vrot.slane %v284, 4
      %v328 = vsel %vm229, %v308, %v327
      %v329 = vrot.slane %v312, 4
      %v330 = vsel %vm229, %v329, %v288
      %v331 = vrot.slane %v288, 4
      %v332 = vsel %vm229, %v312, %v331
      %v333 = vrot.slane %v320, 4
      %v334 = vsel %vm229, %v333, %v296
      %v335 = vrot.slane %v296, 4
      %v336 = vsel %vm229, %v320, %v335
      %v337 = vrot.slane %v324, 4
      %v338 = vsel %vm229, %v337, %v300
      %v339 = vrot.slane %v300, 4
      %v340 = vsel %vm229, %v324, %v339
      %342 = vrot.lane.b32.xlu0 %v328, 8
      %v343 = vpop.permute.xlu0 %342
      %346 = vrot.lane.b32.xlu0 %v330, 16
      %v347 = vpop.permute.xlu0 %346
      %350 = vrot.lane.b32.xlu0 %v332, 24
      %v351 = vpop.permute.xlu0 %350
      %354 = vrot.lane.b32.xlu0 %v334, 32
      %v355 = vpop.permute.xlu0 %354
      %358 = vrot.lane.b32.xlu0 %v336, 40
      %v359 = vpop.permute.xlu0 %358
      %362 = vrot.lane.b32.xlu0 %v338, 48
      %v363 = vpop.permute.xlu0 %362
      %366 = vrot.lane.b32.xlu0 %v340, 56
      %v367 = vpop.permute.xlu0 %366
      %vm369 = vcmask 64512
      %v370 = vsel %vm369, %v326, %v343
      %vm371 = vcmask 130048
      %v372 = vsel %vm371, %v370, %v347
      %vm373 = vcmask 195584
      %v374 = vsel %vm373, %v372, %v351
      %vm375 = vcmask 261120
      %v376 = vsel %vm375, %v374, %v355
      %vm377 = vcmask 326656
      %v378 = vsel %vm377, %v376, %v359
      %vm379 = vcmask 392192
      %v380 = vsel %vm379, %v378, %v363
      %vm381 = vcmask 457728
      %v382 = vsel %vm381, %v380, %v367
      %v384 = vsel %vm369, %v226, 0
      %v387 = vsel %vm369, %v227, 0
      %389 = vmatpush.msra.mxu0 0.0
      %390 = vmatpush.msra.mxu0 0.0
      %391 = vmatpush.msra.mxu0 0.0
      %392 = vmatpush.msra.mxu0 0.0
      %393 = vmatpush.msra.mxu0 0.0
      %394 = vmatpush.msra.mxu0 0.0
      %395 = vmatpush.msra.mxu0 0.0
      %396 = vmatpush.msra.mxu0 0.0
      %397 = vmatpush.msra.mxu0 0.0
      %398 = vmatpush.msra.mxu0 0.0
      %399 = vmatpush.msra.mxu0 0.0
      %400 = vmatpush.msra.mxu0 0.0
      %401 = vmatpush.msra.mxu0 0.0
      %402 = vmatpush.msra.mxu0 0.0
      %403 = vmatpush.msra.mxu0 0.0
      %404 = vmatpush.msra.mxu0 %v382
      %405 = vmatmul.f32.gmra.mxu0 %v384
      %v406 = vpop.f32.mrf.mxu0
      %v407 = vadd.f32 0.0, %v406
      %408 = vmatmul.f32.gmra.mxu0 %v387
      %v409 = vpop.f32.mrf.mxu0
      %v410 = vadd.f32 0.0, %v409
      %411 = vdwg.mxu0
      %414 = vrot.lane.b32.xlu0 %v407, 120
      %v415 = vpop.permute.xlu0 %414
      %416 = vrot.lane.b32.xlu0 %v410, 120
      %v417 = vpop.permute.xlu0 %416
      %420 = vrot.lane.b32.xlu0 %v407, 112
      %v421 = vpop.permute.xlu0 %420
      %422 = vrot.lane.b32.xlu0 %v410, 112
      %v423 = vpop.permute.xlu0 %422
      %426 = vrot.lane.b32.xlu0 %v407, 104
      %v427 = vpop.permute.xlu0 %426
      %428 = vrot.lane.b32.xlu0 %v410, 104
      %v429 = vpop.permute.xlu0 %428
      %432 = vrot.lane.b32.xlu0 %v407, 96
      %v433 = vpop.permute.xlu0 %432
      %434 = vrot.lane.b32.xlu0 %v410, 96
      %v435 = vpop.permute.xlu0 %434
      %438 = vrot.lane.b32.xlu0 %v407, 88
      %v439 = vpop.permute.xlu0 %438
      %440 = vrot.lane.b32.xlu0 %v410, 88
      %v441 = vpop.permute.xlu0 %440
      %444 = vrot.lane.b32.xlu0 %v407, 80
      %v445 = vpop.permute.xlu0 %444
      %446 = vrot.lane.b32.xlu0 %v410, 80
      %v447 = vpop.permute.xlu0 %446
      %450 = vrot.lane.b32.xlu0 %v407, 72
      %v451 = vpop.permute.xlu0 %450
      %452 = vrot.lane.b32.xlu0 %v410, 72
      %v453 = vpop.permute.xlu0 %452
      %v456 = vrot.slane %v421, 4
      %v457 = vsel %vm229, %v456, %v407
      %v458 = vrot.slane %v407, 4
      %v459 = vsel %vm229, %v421, %v458
      %v461 = vunpack.c.l.s4 1983009808
      %v462 = vunpack.c.0.s8 %v461
      %v463 = vperm.slane %v457, %v462
      %v465 = vunpack.c.l.s4 1983009808
      %v466 = vunpack.c.0.s8 %v465
      %v467 = vperm.slane %v459, %v466
      %v468 = vrot.slane %v427, 4
      %v469 = vsel %vm229, %v468, %v415
      %v470 = vrot.slane %v415, 4
      %v471 = vsel %vm229, %v427, %v470
      %v473 = vunpack.c.l.s4 1983009808
      %v474 = vunpack.c.0.s8 %v473
      %v475 = vperm.slane %v469, %v474
      %v477 = vunpack.c.l.s4 1983009808
      %v478 = vunpack.c.0.s8 %v477
      %v479 = vperm.slane %v471, %v478
      %v480 = vrot.slane %v445, 4
      %v481 = vsel %vm229, %v480, %v433
      %v482 = vrot.slane %v433, 4
      %v483 = vsel %vm229, %v445, %v482
      %v485 = vunpack.c.l.s4 1983009808
      %v486 = vunpack.c.0.s8 %v485
      %v487 = vperm.slane %v481, %v486
      %v489 = vunpack.c.l.s4 1983009808
      %v490 = vunpack.c.0.s8 %v489
      %v491 = vperm.slane %v483, %v490
      %v492 = vrot.slane %v451, 4
      %v493 = vsel %vm229, %v492, %v439
      %v494 = vrot.slane %v439, 4
      %v495 = vsel %vm229, %v451, %v494
      %v497 = vunpack.c.l.s4 1983009808
      %v498 = vunpack.c.0.s8 %v497
      %v499 = vperm.slane %v493, %v498
      %v501 = vunpack.c.l.s4 1983009808
      %v502 = vunpack.c.0.s8 %v501
      %v503 = vperm.slane %v495, %v502
      %v504 = vrot.slane %v475, 4
      %v505 = vsel %vm229, %v504, %v463
      %v506 = vrot.slane %v463, 4
      %v507 = vsel %vm229, %v475, %v506
      %v509 = vunpack.c.l.s4 1934713408
      %v510 = vunpack.c.0.s8 %v509
      %v511 = vperm.slane %v505, %v510
      %v513 = vunpack.c.l.s4 1934713408
      %v514 = vunpack.c.0.s8 %v513
      %v515 = vperm.slane %v507, %v514
      %v516 = vrot.slane %v479, 4
      %v517 = vsel %vm229, %v516, %v467
      %v518 = vrot.slane %v467, 4
      %v519 = vsel %vm229, %v479, %v518
      %v521 = vunpack.c.l.s4 1934713408
      %v522 = vunpack.c.0.s8 %v521
      %v523 = vperm.slane %v517, %v522
      %v525 = vunpack.c.l.s4 1934713408
      %v526 = vunpack.c.0.s8 %v525
      %v527 = vperm.slane %v519, %v526
      %v528 = vrot.slane %v499, 4
      %v529 = vsel %vm229, %v528, %v487
      %v530 = vrot.slane %v487, 4
      %v531 = vsel %vm229, %v499, %v530
      %v533 = vunpack.c.l.s4 1934713408
      %v534 = vunpack.c.0.s8 %v533
      %v535 = vperm.slane %v529, %v534
      %v537 = vunpack.c.l.s4 1934713408
      %v538 = vunpack.c.0.s8 %v537
      %v539 = vperm.slane %v531, %v538
      %v540 = vrot.slane %v503, 4
      %v541 = vsel %vm229, %v540, %v491
      %v542 = vrot.slane %v491, 4
      %v543 = vsel %vm229, %v503, %v542
      %v545 = vunpack.c.l.s4 1934713408
      %v546 = vunpack.c.0.s8 %v545
      %v547 = vperm.slane %v541, %v546
      %v549 = vunpack.c.l.s4 1934713408
      %v550 = vunpack.c.0.s8 %v549
      %v551 = vperm.slane %v543, %v550
      %v552 = vrot.slane %v535, 4
      %v553 = vsel %vm229, %v552, %v511
      %v554 = vrot.slane %v511, 4
      %v555 = vsel %vm229, %v535, %v554
      %v556 = vrot.slane %v539, 4
      %v557 = vsel %vm229, %v556, %v515
      %v558 = vrot.slane %v515, 4
      %v559 = vsel %vm229, %v539, %v558
      %v560 = vrot.slane %v547, 4
      %v561 = vsel %vm229, %v560, %v523
      %v562 = vrot.slane %v523, 4
      %v563 = vsel %vm229, %v547, %v562
      %v564 = vrot.slane %v551, 4
      %v565 = vsel %vm229, %v564, %v527
      %v566 = vrot.slane %v527, 4
      %v567 = vsel %vm229, %v551, %v566
      %v568 = vrot.slane %v423, 4
      %v569 = vsel %vm229, %v568, %v410
      %v570 = vrot.slane %v410, 4
      %v571 = vsel %vm229, %v423, %v570
      %v573 = vunpack.c.l.s4 1983009808
      %v574 = vunpack.c.0.s8 %v573
      %v575 = vperm.slane %v569, %v574
      %v577 = vunpack.c.l.s4 1983009808
      %v578 = vunpack.c.0.s8 %v577
      %v579 = vperm.slane %v571, %v578
      %v580 = vrot.slane %v429, 4
      %v581 = vsel %vm229, %v580, %v417
      %v582 = vrot.slane %v417, 4
      %v583 = vsel %vm229, %v429, %v582
      %v585 = vunpack.c.l.s4 1983009808
      %v586 = vunpack.c.0.s8 %v585
      %v587 = vperm.slane %v581, %v586
      %v589 = vunpack.c.l.s4 1983009808
      %v590 = vunpack.c.0.s8 %v589
      %v591 = vperm.slane %v583, %v590
      %v592 = vrot.slane %v447, 4
      %v593 = vsel %vm229, %v592, %v435
      %v594 = vrot.slane %v435, 4
      %v595 = vsel %vm229, %v447, %v594
      %v597 = vunpack.c.l.s4 1983009808
      %v598 = vunpack.c.0.s8 %v597
      %v599 = vperm.slane %v593, %v598
      %v601 = vunpack.c.l.s4 1983009808
      %v602 = vunpack.c.0.s8 %v601
      %v603 = vperm.slane %v595, %v602
      %v604 = vrot.slane %v453, 4
      %v605 = vsel %vm229, %v604, %v441
      %v606 = vrot.slane %v441, 4
      %v607 = vsel %vm229, %v453, %v606
      %v609 = vunpack.c.l.s4 1983009808
      %v610 = vunpack.c.0.s8 %v609
      %v611 = vperm.slane %v605, %v610
      %v613 = vunpack.c.l.s4 1983009808
      %v614 = vunpack.c.0.s8 %v613
      %v615 = vperm.slane %v607, %v614
      %v616 = vrot.slane %v587, 4
      %v617 = vsel %vm229, %v616, %v575
      %v618 = vrot.slane %v575, 4
      %v619 = vsel %vm229, %v587, %v618
      %v621 = vunpack.c.l.s4 1934713408
      %v622 = vunpack.c.0.s8 %v621
      %v623 = vperm.slane %v617, %v622
      %v625 = vunpack.c.l.s4 1934713408
      %v626 = vunpack.c.0.s8 %v625
      %v627 = vperm.slane %v619, %v626
      %v628 = vrot.slane %v591, 4
      %v629 = vsel %vm229, %v628, %v579
      %v630 = vrot.slane %v579, 4
      %v631 = vsel %vm229, %v591, %v630
      %v633 = vunpack.c.l.s4 1934713408
      %v634 = vunpack.c.0.s8 %v633
      %v635 = vperm.slane %v629, %v634
      %v637 = vunpack.c.l.s4 1934713408
      %v638 = vunpack.c.0.s8 %v637
      %v639 = vperm.slane %v631, %v638
      %v640 = vrot.slane %v611, 4
      %v641 = vsel %vm229, %v640, %v599
      %v642 = vrot.slane %v599, 4
      %v643 = vsel %vm229, %v611, %v642
      %v645 = vunpack.c.l.s4 1934713408
      %v646 = vunpack.c.0.s8 %v645
      %v647 = vperm.slane %v641, %v646
      %v649 = vunpack.c.l.s4 1934713408
      %v650 = vunpack.c.0.s8 %v649
      %v651 = vperm.slane %v643, %v650
      %v652 = vrot.slane %v615, 4
      %v653 = vsel %vm229, %v652, %v603
      %v654 = vrot.slane %v603, 4
      %v655 = vsel %vm229, %v615, %v654
      %v657 = vunpack.c.l.s4 1934713408
      %v658 = vunpack.c.0.s8 %v657
      %v659 = vperm.slane %v653, %v658
      %v661 = vunpack.c.l.s4 1934713408
      %v662 = vunpack.c.0.s8 %v661
      %v663 = vperm.slane %v655, %v662
      %v664 = vrot.slane %v647, 4
      %v665 = vsel %vm229, %v664, %v623
      %v666 = vrot.slane %v623, 4
      %v667 = vsel %vm229, %v647, %v666
      %v668 = vrot.slane %v651, 4
      %v669 = vsel %vm229, %v668, %v627
      %v670 = vrot.slane %v627, 4
      %v671 = vsel %vm229, %v651, %v670
      %v672 = vrot.slane %v659, 4
      %v673 = vsel %vm229, %v672, %v635
      %v674 = vrot.slane %v635, 4
      %v675 = vsel %vm229, %v659, %v674
      %v676 = vrot.slane %v663, 4
      %v677 = vsel %vm229, %v676, %v639
      %v678 = vrot.slane %v639, 4
      %v679 = vsel %vm229, %v663, %v678
      %680 = vxpose.xlu0.b32.start [1/16] %v553, 128
      %681 = vxpose.xlu0.b32.cont [2/16] 0.0, 128
      %682 = vxpose.xlu0.b32.cont [3/16] 0.0, 128
      %683 = vxpose.xlu0.b32.cont [4/16] 0.0, 128
      %684 = vxpose.xlu0.b32.cont [5/16] 0.0, 128
      %685 = vxpose.xlu0.b32.cont [6/16] 0.0, 128
      %686 = vxpose.xlu0.b32.cont [7/16] 0.0, 128
      %687 = vxpose.xlu0.b32.cont [8/16] 0.0, 128
      %688 = vxpose.xlu0.b32.cont [9/16] 0.0, 128
      %689 = vxpose.xlu0.b32.cont [10/16] 0.0, 128
      %690 = vxpose.xlu0.b32.cont [11/16] 0.0, 128
      %691 = vxpose.xlu0.b32.cont [12/16] 0.0, 128
      %692 = vxpose.xlu0.b32.cont [13/16] 0.0, 128
      %693 = vxpose.xlu0.b32.cont [14/16] 0.0, 128
      %694 = vxpose.xlu0.b32.cont [15/16] 0.0, 128
      %695 = vxpose.xlu0.b32.end [16/16] 0.0, 128
      %v696 = vpop.trf.xlu0
      %v697 = vpop.trf.xlu0
      %v698 = vpop.trf.xlu0
      %v699 = vpop.trf.xlu0
      %v700 = vpop.trf.xlu0
      %v701 = vpop.trf.xlu0
      %v702 = vpop.trf.xlu0
      %v703 = vpop.trf.xlu0
      %v704 = vpop.trf.xlu0
      %v705 = vpop.trf.xlu0
      %v706 = vpop.trf.xlu0
      %v707 = vpop.trf.xlu0
      %v708 = vpop.trf.xlu0
      %v709 = vpop.trf.xlu0
      %v710 = vpop.trf.xlu0
      %v711 = vpop.trf.xlu0
      %712 = vxpose.xlu0.b32.start [1/16] %v555, 128
      %713 = vxpose.xlu0.b32.cont [2/16] 0.0, 128
      %714 = vxpose.xlu0.b32.cont [3/16] 0.0, 128
      %715 = vxpose.xlu0.b32.cont [4/16] 0.0, 128
      %716 = vxpose.xlu0.b32.cont [5/16] 0.0, 128
      %717 = vxpose.xlu0.b32.cont [6/16] 0.0, 128
      %718 = vxpose.xlu0.b32.cont [7/16] 0.0, 128
      %719 = vxpose.xlu0.b32.cont [8/16] 0.0, 128
      %720 = vxpose.xlu0.b32.cont [9/16] 0.0, 128
      %721 = vxpose.xlu0.b32.cont [10/16] 0.0, 128
      %722 = vxpose.xlu0.b32.cont [11/16] 0.0, 128
      %723 = vxpose.xlu0.b32.cont [12/16] 0.0, 128
      %724 = vxpose.xlu0.b32.cont [13/16] 0.0, 128
      %725 = vxpose.xlu0.b32.cont [14/16] 0.0, 128
      %726 = vxpose.xlu0.b32.cont [15/16] 0.0, 128
      %727 = vxpose.xlu0.b32.end [16/16] 0.0, 128
      %v728 = vpop.trf.xlu0
      %v729 = vpop.trf.xlu0
      %v730 = vpop.trf.xlu0
      %v731 = vpop.trf.xlu0
      %v732 = vpop.trf.xlu0
      %v733 = vpop.trf.xlu0
      %v734 = vpop.trf.xlu0
      %v735 = vpop.trf.xlu0
      %v736 = vpop.trf.xlu0
      %v737 = vpop.trf.xlu0
      %v738 = vpop.trf.xlu0
      %v739 = vpop.trf.xlu0
      %v740 = vpop.trf.xlu0
      %v741 = vpop.trf.xlu0
      %v742 = vpop.trf.xlu0
      %v743 = vpop.trf.xlu0
      %744 = vxpose.xlu0.b32.start [1/16] %v557, 128
      %745 = vxpose.xlu0.b32.cont [2/16] 0.0, 128
      %746 = vxpose.xlu0.b32.cont [3/16] 0.0, 128
      %747 = vxpose.xlu0.b32.cont [4/16] 0.0, 128
      %748 = vxpose.xlu0.b32.cont [5/16] 0.0, 128
      %749 = vxpose.xlu0.b32.cont [6/16] 0.0, 128
      %750 = vxpose.xlu0.b32.cont [7/16] 0.0, 128
      %751 = vxpose.xlu0.b32.cont [8/16] 0.0, 128
      %752 = vxpose.xlu0.b32.cont [9/16] 0.0, 128
      %753 = vxpose.xlu0.b32.cont [10/16] 0.0, 128
      %754 = vxpose.xlu0.b32.cont [11/16] 0.0, 128
      %755 = vxpose.xlu0.b32.cont [12/16] 0.0, 128
      %756 = vxpose.xlu0.b32.cont [13/16] 0.0, 128
      %757 = vxpose.xlu0.b32.cont [14/16] 0.0, 128
      %758 = vxpose.xlu0.b32.cont [15/16] 0.0, 128
      %759 = vxpose.xlu0.b32.end [16/16] 0.0, 128
      %v760 = vpop.trf.xlu0
      %v761 = vpop.trf.xlu0
      %v762 = vpop.trf.xlu0
      %v763 = vpop.trf.xlu0
      %v764 = vpop.trf.xlu0
      %v765 = vpop.trf.xlu0
      %v766 = vpop.trf.xlu0
      %v767 = vpop.trf.xlu0
      %v768 = vpop.trf.xlu0
      %v769 = vpop.trf.xlu0
      %v770 = vpop.trf.xlu0
      %v771 = vpop.trf.xlu0
      %v772 = vpop.trf.xlu0
      %v773 = vpop.trf.xlu0
      %v774 = vpop.trf.xlu0
      %v775 = vpop.trf.xlu0
      %776 = vxpose.xlu0.b32.start [1/16] %v559, 128
      %777 = vxpose.xlu0.b32.cont [2/16] 0.0, 128
      %778 = vxpose.xlu0.b32.cont [3/16] 0.0, 128
      %779 = vxpose.xlu0.b32.cont [4/16] 0.0, 128
      %780 = vxpose.xlu0.b32.cont [5/16] 0.0, 128
      %781 = vxpose.xlu0.b32.cont [6/16] 0.0, 128
      %782 = vxpose.xlu0.b32.cont [7/16] 0.0, 128
      %783 = vxpose.xlu0.b32.cont [8/16] 0.0, 128
      %784 = vxpose.xlu0.b32.cont [9/16] 0.0, 128
      %785 = vxpose.xlu0.b32.cont [10/16] 0.0, 128
      %786 = vxpose.xlu0.b32.cont [11/16] 0.0, 128
      %787 = vxpose.xlu0.b32.cont [12/16] 0.0, 128
      %788 = vxpose.xlu0.b32.cont [13/16] 0.0, 128
      %789 = vxpose.xlu0.b32.cont [14/16] 0.0, 128
      %790 = vxpose.xlu0.b32.cont [15/16] 0.0, 128
      %791 = vxpose.xlu0.b32.end [16/16] 0.0, 128
      %v792 = vpop.trf.xlu0
      %v793 = vpop.trf.xlu0
      %v794 = vpop.trf.xlu0
      %v795 = vpop.trf.xlu0
      %v796 = vpop.trf.xlu0
      %v797 = vpop.trf.xlu0
      %v798 = vpop.trf.xlu0
      %v799 = vpop.trf.xlu0
      %v800 = vpop.trf.xlu0
      %v801 = vpop.trf.xlu0
      %v802 = vpop.trf.xlu0
      %v803 = vpop.trf.xlu0
      %v804 = vpop.trf.xlu0
      %v805 = vpop.trf.xlu0
      %v806 = vpop.trf.xlu0
      %v807 = vpop.trf.xlu0
      %808 = vxpose.xlu0.b32.start [1/16] %v561, 128
      %809 = vxpose.xlu0.b32.cont [2/16] 0.0, 128
      %810 = vxpose.xlu0.b32.cont [3/16] 0.0, 128
      %811 = vxpose.xlu0.b32.cont [4/16] 0.0, 128
      %812 = vxpose.xlu0.b32.cont [5/16] 0.0, 128
      %813 = vxpose.xlu0.b32.cont [6/16] 0.0, 128
      %814 = vxpose.xlu0.b32.cont [7/16] 0.0, 128
      %815 = vxpose.xlu0.b32.cont [8/16] 0.0, 128
      %816 = vxpose.xlu0.b32.cont [9/16] 0.0, 128
      %817 = vxpose.xlu0.b32.cont [10/16] 0.0, 128
      %818 = vxpose.xlu0.b32.cont [11/16] 0.0, 128
      %819 = vxpose.xlu0.b32.cont [12/16] 0.0, 128
      %820 = vxpose.xlu0.b32.cont [13/16] 0.0, 128
      %821 = vxpose.xlu0.b32.cont [14/16] 0.0, 128
      %822 = vxpose.xlu0.b32.cont [15/16] 0.0, 128
      %823 = vxpose.xlu0.b32.end [16/16] 0.0, 128
      %v824 = vpop.trf.xlu0
      %v825 = vpop.trf.xlu0
      %v826 = vpop.trf.xlu0
      %v827 = vpop.trf.xlu0
      %v828 = vpop.trf.xlu0
      %v829 = vpop.trf.xlu0
      %v830 = vpop.trf.xlu0
      %v831 = vpop.trf.xlu0
      %v832 = vpop.trf.xlu0
      %v833 = vpop.trf.xlu0
      %v834 = vpop.trf.xlu0
      %v835 = vpop.trf.xlu0
      %v836 = vpop.trf.xlu0
      %v837 = vpop.trf.xlu0
      %v838 = vpop.trf.xlu0
      %v839 = vpop.trf.xlu0
      %840 = vxpose.xlu0.b32.start [1/16] %v563, 128
      %841 = vxpose.xlu0.b32.cont [2/16] 0.0, 128
      %842 = vxpose.xlu0.b32.cont [3/16] 0.0, 128
      %843 = vxpose.xlu0.b32.cont [4/16] 0.0, 128
      %844 = vxpose.xlu0.b32.cont [5/16] 0.0, 128
      %845 = vxpose.xlu0.b32.cont [6/16] 0.0, 128
      %846 = vxpose.xlu0.b32.cont [7/16] 0.0, 128
      %847 = vxpose.xlu0.b32.cont [8/16] 0.0, 128
      %848 = vxpose.xlu0.b32.cont [9/16] 0.0, 128
      %849 = vxpose.xlu0.b32.cont [10/16] 0.0, 128
      %850 = vxpose.xlu0.b32.cont [11/16] 0.0, 128
      %851 = vxpose.xlu0.b32.cont [12/16] 0.0, 128
      %852 = vxpose.xlu0.b32.cont [13/16] 0.0, 128
      %853 = vxpose.xlu0.b32.cont [14/16] 0.0, 128
      %854 = vxpose.xlu0.b32.cont [15/16] 0.0, 128
      %855 = vxpose.xlu0.b32.end [16/16] 0.0, 128
      %v856 = vpop.trf.xlu0
      %v857 = vpop.trf.xlu0
      %v858 = vpop.trf.xlu0
      %v859 = vpop.trf.xlu0
      %v860 = vpop.trf.xlu0
      %v861 = vpop.trf.xlu0
      %v862 = vpop.trf.xlu0
      %v863 = vpop.trf.xlu0
      %v864 = vpop.trf.xlu0
      %v865 = vpop.trf.xlu0
      %v866 = vpop.trf.xlu0
      %v867 = vpop.trf.xlu0
      %v868 = vpop.trf.xlu0
      %v869 = vpop.trf.xlu0
      %v870 = vpop.trf.xlu0
      %v871 = vpop.trf.xlu0
      %872 = vxpose.xlu0.b32.start [1/16] %v565, 128
      %873 = vxpose.xlu0.b32.cont [2/16] 0.0, 128
      %874 = vxpose.xlu0.b32.cont [3/16] 0.0, 128
      %875 = vxpose.xlu0.b32.cont [4/16] 0.0, 128
      %876 = vxpose.xlu0.b32.cont [5/16] 0.0, 128
      %877 = vxpose.xlu0.b32.cont [6/16] 0.0, 128
      %878 = vxpose.xlu0.b32.cont [7/16] 0.0, 128
      %879 = vxpose.xlu0.b32.cont [8/16] 0.0, 128
      %880 = vxpose.xlu0.b32.cont [9/16] 0.0, 128
      %881 = vxpose.xlu0.b32.cont [10/16] 0.0, 128
      %882 = vxpose.xlu0.b32.cont [11/16] 0.0, 128
      %883 = vxpose.xlu0.b32.cont [12/16] 0.0, 128
      %884 = vxpose.xlu0.b32.cont [13/16] 0.0, 128
      %885 = vxpose.xlu0.b32.cont [14/16] 0.0, 128
      %886 = vxpose.xlu0.b32.cont [15/16] 0.0, 128
      %887 = vxpose.xlu0.b32.end [16/16] 0.0, 128
      %v888 = vpop.trf.xlu0
      %v889 = vpop.trf.xlu0
      %v890 = vpop.trf.xlu0
      %v891 = vpop.trf.xlu0
      %v892 = vpop.trf.xlu0
      %v893 = vpop.trf.xlu0
      %v894 = vpop.trf.xlu0
      %v895 = vpop.trf.xlu0
      %v896 = vpop.trf.xlu0
      %v897 = vpop.trf.xlu0
      %v898 = vpop.trf.xlu0
      %v899 = vpop.trf.xlu0
      %v900 = vpop.trf.xlu0
      %v901 = vpop.trf.xlu0
      %v902 = vpop.trf.xlu0
      %v903 = vpop.trf.xlu0
      %904 = vxpose.xlu0.b32.start [1/16] %v567, 128
      %905 = vxpose.xlu0.b32.cont [2/16] 0.0, 128
      %906 = vxpose.xlu0.b32.cont [3/16] 0.0, 128
      %907 = vxpose.xlu0.b32.cont [4/16] 0.0, 128
      %908 = vxpose.xlu0.b32.cont [5/16] 0.0, 128
      %909 = vxpose.xlu0.b32.cont [6/16] 0.0, 128
      %910 = vxpose.xlu0.b32.cont [7/16] 0.0, 128
      %911 = vxpose.xlu0.b32.cont [8/16] 0.0, 128
      %912 = vxpose.xlu0.b32.cont [9/16] 0.0, 128
      %913 = vxpose.xlu0.b32.cont [10/16] 0.0, 128
      %914 = vxpose.xlu0.b32.cont [11/16] 0.0, 128
      %915 = vxpose.xlu0.b32.cont [12/16] 0.0, 128
      %916 = vxpose.xlu0.b32.cont [13/16] 0.0, 128
      %917 = vxpose.xlu0.b32.cont [14/16] 0.0, 128
      %918 = vxpose.xlu0.b32.cont [15/16] 0.0, 128
      %919 = vxpose.xlu0.b32.end [16/16] 0.0, 128
      %v920 = vpop.trf.xlu0
      %v921 = vpop.trf.xlu0
      %v922 = vpop.trf.xlu0
      %v923 = vpop.trf.xlu0
      %v924 = vpop.trf.xlu0
      %v925 = vpop.trf.xlu0
      %v926 = vpop.trf.xlu0
      %v927 = vpop.trf.xlu0
      %v928 = vpop.trf.xlu0
      %v929 = vpop.trf.xlu0
      %v930 = vpop.trf.xlu0
      %v931 = vpop.trf.xlu0
      %v932 = vpop.trf.xlu0
      %v933 = vpop.trf.xlu0
      %v934 = vpop.trf.xlu0
      %v935 = vpop.trf.xlu0
      %936 = vxpose.xlu0.b32.start [1/16] %v665, 128
      %937 = vxpose.xlu0.b32.cont [2/16] 0.0, 128
      %938 = vxpose.xlu0.b32.cont [3/16] 0.0, 128
      %939 = vxpose.xlu0.b32.cont [4/16] 0.0, 128
      %940 = vxpose.xlu0.b32.cont [5/16] 0.0, 128
      %941 = vxpose.xlu0.b32.cont [6/16] 0.0, 128
      %942 = vxpose.xlu0.b32.cont [7/16] 0.0, 128
      %943 = vxpose.xlu0.b32.cont [8/16] 0.0, 128
      %944 = vxpose.xlu0.b32.cont [9/16] 0.0, 128
      %945 = vxpose.xlu0.b32.cont [10/16] 0.0, 128
      %946 = vxpose.xlu0.b32.cont [11/16] 0.0, 128
      %947 = vxpose.xlu0.b32.cont [12/16] 0.0, 128
      %948 = vxpose.xlu0.b32.cont [13/16] 0.0, 128
      %949 = vxpose.xlu0.b32.cont [14/16] 0.0, 128
      %950 = vxpose.xlu0.b32.cont [15/16] 0.0, 128
      %951 = vxpose.xlu0.b32.end [16/16] 0.0, 128
      %v952 = vpop.trf.xlu0
      %v953 = vpop.trf.xlu0
      %v954 = vpop.trf.xlu0
      %v955 = vpop.trf.xlu0
      %v956 = vpop.trf.xlu0
      %v957 = vpop.trf.xlu0
      %v958 = vpop.trf.xlu0
      %v959 = vpop.trf.xlu0
      %v960 = vpop.trf.xlu0
      %v961 = vpop.trf.xlu0
      %v962 = vpop.trf.xlu0
      %v963 = vpop.trf.xlu0
      %v964 = vpop.trf.xlu0
      %v965 = vpop.trf.xlu0
      %v966 = vpop.trf.xlu0
      %v967 = vpop.trf.xlu0
      %968 = vxpose.xlu0.b32.start [1/16] %v667, 128
      %969 = vxpose.xlu0.b32.cont [2/16] 0.0, 128
      %970 = vxpose.xlu0.b32.cont [3/16] 0.0, 128
      %971 = vxpose.xlu0.b32.cont [4/16] 0.0, 128
      %972 = vxpose.xlu0.b32.cont [5/16] 0.0, 128
      %973 = vxpose.xlu0.b32.cont [6/16] 0.0, 128
      %974 = vxpose.xlu0.b32.cont [7/16] 0.0, 128
      %975 = vxpose.xlu0.b32.cont [8/16] 0.0, 128
      %976 = vxpose.xlu0.b32.cont [9/16] 0.0, 128
      %977 = vxpose.xlu0.b32.cont [10/16] 0.0, 128
      %978 = vxpose.xlu0.b32.cont [11/16] 0.0, 128
      %979 = vxpose.xlu0.b32.cont [12/16] 0.0, 128
      %980 = vxpose.xlu0.b32.cont [13/16] 0.0, 128
      %981 = vxpose.xlu0.b32.cont [14/16] 0.0, 128
      %982 = vxpose.xlu0.b32.cont [15/16] 0.0, 128
      %983 = vxpose.xlu0.b32.end [16/16] 0.0, 128
      %v984 = vpop.trf.xlu0
      %v985 = vpop.trf.xlu0
      %v986 = vpop.trf.xlu0
      %v987 = vpop.trf.xlu0
      %v988 = vpop.trf.xlu0
      %v989 = vpop.trf.xlu0
      %v990 = vpop.trf.xlu0
      %v991 = vpop.trf.xlu0
      %v992 = vpop.trf.xlu0
      %v993 = vpop.trf.xlu0
      %v994 = vpop.trf.xlu0
      %v995 = vpop.trf.xlu0
      %v996 = vpop.trf.xlu0
      %v997 = vpop.trf.xlu0
      %v998 = vpop.trf.xlu0
      %v999 = vpop.trf.xlu0
      %1000 = vxpose.xlu0.b32.start [1/16] %v669, 128
      %1001 = vxpose.xlu0.b32.cont [2/16] 0.0, 128
      %1002 = vxpose.xlu0.b32.cont [3/16] 0.0, 128
      %1003 = vxpose.xlu0.b32.cont [4/16] 0.0, 128
      %1004 = vxpose.xlu0.b32.cont [5/16] 0.0, 128
      %1005 = vxpose.xlu0.b32.cont [6/16] 0.0, 128
      %1006 = vxpose.xlu0.b32.cont [7/16] 0.0, 128
      %1007 = vxpose.xlu0.b32.cont [8/16] 0.0, 128
      %1008 = vxpose.xlu0.b32.cont [9/16] 0.0, 128
      %1009 = vxpose.xlu0.b32.cont [10/16] 0.0, 128
      %1010 = vxpose.xlu0.b32.cont [11/16] 0.0, 128
      %1011 = vxpose.xlu0.b32.cont [12/16] 0.0, 128
      %1012 = vxpose.xlu0.b32.cont [13/16] 0.0, 128
      %1013 = vxpose.xlu0.b32.cont [14/16] 0.0, 128
      %1014 = vxpose.xlu0.b32.cont [15/16] 0.0, 128
      %1015 = vxpose.xlu0.b32.end [16/16] 0.0, 128
      %v1016 = vpop.trf.xlu0
      %v1017 = vpop.trf.xlu0
      %v1018 = vpop.trf.xlu0
      %v1019 = vpop.trf.xlu0
      %v1020 = vpop.trf.xlu0
      %v1021 = vpop.trf.xlu0
      %v1022 = vpop.trf.xlu0
      %v1023 = vpop.trf.xlu0
      %v1024 = vpop.trf.xlu0
      %v1025 = vpop.trf.xlu0
      %v1026 = vpop.trf.xlu0
      %v1027 = vpop.trf.xlu0
      %v1028 = vpop.trf.xlu0
      %v1029 = vpop.trf.xlu0
      %v1030 = vpop.trf.xlu0
      %v1031 = vpop.trf.xlu0
      %1032 = vxpose.xlu0.b32.start [1/16] %v671, 128
      %1033 = vxpose.xlu0.b32.cont [2/16] 0.0, 128
      %1034 = vxpose.xlu0.b32.cont [3/16] 0.0, 128
      %1035 = vxpose.xlu0.b32.cont [4/16] 0.0, 128
      %1036 = vxpose.xlu0.b32.cont [5/16] 0.0, 128
      %1037 = vxpose.xlu0.b32.cont [6/16] 0.0, 128
      %1038 = vxpose.xlu0.b32.cont [7/16] 0.0, 128
      %1039 = vxpose.xlu0.b32.cont [8/16] 0.0, 128
      %1040 = vxpose.xlu0.b32.cont [9/16] 0.0, 128
      %1041 = vxpose.xlu0.b32.cont [10/16] 0.0, 128
      %1042 = vxpose.xlu0.b32.cont [11/16] 0.0, 128
      %1043 = vxpose.xlu0.b32.cont [12/16] 0.0, 128
      %1044 = vxpose.xlu0.b32.cont [13/16] 0.0, 128
      %1045 = vxpose.xlu0.b32.cont [14/16] 0.0, 128
      %1046 = vxpose.xlu0.b32.cont [15/16] 0.0, 128
      %1047 = vxpose.xlu0.b32.end [16/16] 0.0, 128
      %v1048 = vpop.trf.xlu0
      %v1049 = vpop.trf.xlu0
      %v1050 = vpop.trf.xlu0
      %v1051 = vpop.trf.xlu0
      %v1052 = vpop.trf.xlu0
      %v1053 = vpop.trf.xlu0
      %v1054 = vpop.trf.xlu0
      %v1055 = vpop.trf.xlu0
      %v1056 = vpop.trf.xlu0
      %v1057 = vpop.trf.xlu0
      %v1058 = vpop.trf.xlu0
      %v1059 = vpop.trf.xlu0
      %v1060 = vpop.trf.xlu0
      %v1061 = vpop.trf.xlu0
      %v1062 = vpop.trf.xlu0
      %v1063 = vpop.trf.xlu0
      %1064 = vxpose.xlu0.b32.start [1/16] %v673, 128
      %1065 = vxpose.xlu0.b32.cont [2/16] 0.0, 128
      %1066 = vxpose.xlu0.b32.cont [3/16] 0.0, 128
      %1067 = vxpose.xlu0.b32.cont [4/16] 0.0, 128
      %1068 = vxpose.xlu0.b32.cont [5/16] 0.0, 128
      %1069 = vxpose.xlu0.b32.cont [6/16] 0.0, 128
      %1070 = vxpose.xlu0.b32.cont [7/16] 0.0, 128
      %1071 = vxpose.xlu0.b32.cont [8/16] 0.0, 128
      %1072 = vxpose.xlu0.b32.cont [9/16] 0.0, 128
      %1073 = vxpose.xlu0.b32.cont [10/16] 0.0, 128
      %1074 = vxpose.xlu0.b32.cont [11/16] 0.0, 128
      %1075 = vxpose.xlu0.b32.cont [12/16] 0.0, 128
      %1076 = vxpose.xlu0.b32.cont [13/16] 0.0, 128
      %1077 = vxpose.xlu0.b32.cont [14/16] 0.0, 128
      %1078 = vxpose.xlu0.b32.cont [15/16] 0.0, 128
      %1079 = vxpose.xlu0.b32.end [16/16] 0.0, 128
      %v1080 = vpop.trf.xlu0
      %v1081 = vpop.trf.xlu0
      %v1082 = vpop.trf.xlu0
      %v1083 = vpop.trf.xlu0
      %v1084 = vpop.trf.xlu0
      %v1085 = vpop.trf.xlu0
      %v1086 = vpop.trf.xlu0
      %v1087 = vpop.trf.xlu0
      %v1088 = vpop.trf.xlu0
      %v1089 = vpop.trf.xlu0
      %v1090 = vpop.trf.xlu0
      %v1091 = vpop.trf.xlu0
      %v1092 = vpop.trf.xlu0
      %v1093 = vpop.trf.xlu0
      %v1094 = vpop.trf.xlu0
      %v1095 = vpop.trf.xlu0
      %1096 = vxpose.xlu0.b32.start [1/16] %v675, 128
      %1097 = vxpose.xlu0.b32.cont [2/16] 0.0, 128
      %1098 = vxpose.xlu0.b32.cont [3/16] 0.0, 128
      %1099 = vxpose.xlu0.b32.cont [4/16] 0.0, 128
      %1100 = vxpose.xlu0.b32.cont [5/16] 0.0, 128
      %1101 = vxpose.xlu0.b32.cont [6/16] 0.0, 128
      %1102 = vxpose.xlu0.b32.cont [7/16] 0.0, 128
      %1103 = vxpose.xlu0.b32.cont [8/16] 0.0, 128
      %1104 = vxpose.xlu0.b32.cont [9/16] 0.0, 128
      %1105 = vxpose.xlu0.b32.cont [10/16] 0.0, 128
      %1106 = vxpose.xlu0.b32.cont [11/16] 0.0, 128
      %1107 = vxpose.xlu0.b32.cont [12/16] 0.0, 128
      %1108 = vxpose.xlu0.b32.cont [13/16] 0.0, 128
      %1109 = vxpose.xlu0.b32.cont [14/16] 0.0, 128
      %1110 = vxpose.xlu0.b32.cont [15/16] 0.0, 128
      %1111 = vxpose.xlu0.b32.end [16/16] 0.0, 128
      %v1112 = vpop.trf.xlu0
      %v1113 = vpop.trf.xlu0
      %v1114 = vpop.trf.xlu0
      %v1115 = vpop.trf.xlu0
      %v1116 = vpop.trf.xlu0
      %v1117 = vpop.trf.xlu0
      %v1118 = vpop.trf.xlu0
      %v1119 = vpop.trf.xlu0
      %v1120 = vpop.trf.xlu0
      %v1121 = vpop.trf.xlu0
      %v1122 = vpop.trf.xlu0
      %v1123 = vpop.trf.xlu0
      %v1124 = vpop.trf.xlu0
      %v1125 = vpop.trf.xlu0
      %v1126 = vpop.trf.xlu0
      %v1127 = vpop.trf.xlu0
      %1128 = vxpose.xlu0.b32.start [1/16] %v677, 128
      %1129 = vxpose.xlu0.b32.cont [2/16] 0.0, 128
      %1130 = vxpose.xlu0.b32.cont [3/16] 0.0, 128
      %1131 = vxpose.xlu0.b32.cont [4/16] 0.0, 128
      %1132 = vxpose.xlu0.b32.cont [5/16] 0.0, 128
      %1133 = vxpose.xlu0.b32.cont [6/16] 0.0, 128
      %1134 = vxpose.xlu0.b32.cont [7/16] 0.0, 128
      %1135 = vxpose.xlu0.b32.cont [8/16] 0.0, 128
      %1136 = vxpose.xlu0.b32.cont [9/16] 0.0, 128
      %1137 = vxpose.xlu0.b32.cont [10/16] 0.0, 128
      %1138 = vxpose.xlu0.b32.cont [11/16] 0.0, 128
      %1139 = vxpose.xlu0.b32.cont [12/16] 0.0, 128
      %1140 = vxpose.xlu0.b32.cont [13/16] 0.0, 128
      %1141 = vxpose.xlu0.b32.cont [14/16] 0.0, 128
      %1142 = vxpose.xlu0.b32.cont [15/16] 0.0, 128
      %1143 = vxpose.xlu0.b32.end [16/16] 0.0, 128
      %v1144 = vpop.trf.xlu0
      %v1145 = vpop.trf.xlu0
      %v1146 = vpop.trf.xlu0
      %v1147 = vpop.trf.xlu0
      %v1148 = vpop.trf.xlu0
      %v1149 = vpop.trf.xlu0
      %v1150 = vpop.trf.xlu0
      %v1151 = vpop.trf.xlu0
      %v1152 = vpop.trf.xlu0
      %v1153 = vpop.trf.xlu0
      %v1154 = vpop.trf.xlu0
      %v1155 = vpop.trf.xlu0
      %v1156 = vpop.trf.xlu0
      %v1157 = vpop.trf.xlu0
      %v1158 = vpop.trf.xlu0
      %v1159 = vpop.trf.xlu0
      %1160 = vxpose.xlu0.b32.start [1/16] %v679, 128
      %1161 = vxpose.xlu0.b32.cont [2/16] 0.0, 128
      %1162 = vxpose.xlu0.b32.cont [3/16] 0.0, 128
      %1163 = vxpose.xlu0.b32.cont [4/16] 0.0, 128
      %1164 = vxpose.xlu0.b32.cont [5/16] 0.0, 128
      %1165 = vxpose.xlu0.b32.cont [6/16] 0.0, 128
      %1166 = vxpose.xlu0.b32.cont [7/16] 0.0, 128
      %1167 = vxpose.xlu0.b32.cont [8/16] 0.0, 128
      %1168 = vxpose.xlu0.b32.cont [9/16] 0.0, 128
      %1169 = vxpose.xlu0.b32.cont [10/16] 0.0, 128
      %1170 = vxpose.xlu0.b32.cont [11/16] 0.0, 128
      %1171 = vxpose.xlu0.b32.cont [12/16] 0.0, 128
      %1172 = vxpose.xlu0.b32.cont [13/16] 0.0, 128
      %1173 = vxpose.xlu0.b32.cont [14/16] 0.0, 128
      %1174 = vxpose.xlu0.b32.cont [15/16] 0.0, 128
      %1175 = vxpose.xlu0.b32.end [16/16] 0.0, 128
      %v1176 = vpop.trf.xlu0
      %v1177 = vpop.trf.xlu0
      %v1178 = vpop.trf.xlu0
      %v1179 = vpop.trf.xlu0
      %v1180 = vpop.trf.xlu0
      %v1181 = vpop.trf.xlu0
      %v1182 = vpop.trf.xlu0
      %v1183 = vpop.trf.xlu0
      %v1184 = vpop.trf.xlu0
      %v1185 = vpop.trf.xlu0
      %v1186 = vpop.trf.xlu0
      %v1187 = vpop.trf.xlu0
      %v1188 = vpop.trf.xlu0
      %v1189 = vpop.trf.xlu0
      %v1190 = vpop.trf.xlu0
      %v1191 = vpop.trf.xlu0
      %v1192 = vld [vmem:[%s3] sm:$0xff]
      %v1194 = vsel %vm369, %v696, 0
      %v1197 = vsel %vm369, %v728, 0
      %v1200 = vsel %vm369, %v760, 0
      %v1203 = vsel %vm369, %v792, 0
      %v1206 = vsel %vm369, %v824, 0
      %v1209 = vsel %vm369, %v856, 0
      %v1212 = vsel %vm369, %v888, 0
      %v1215 = vsel %vm369, %v920, 0
      %v1218 = vsel %vm369, %v952, 0
      %v1221 = vsel %vm369, %v984, 0
      %v1224 = vsel %vm369, %v1016, 0
      %v1227 = vsel %vm369, %v1048, 0
      %v1230 = vsel %vm369, %v1080, 0
      %v1233 = vsel %vm369, %v1112, 0
      %v1236 = vsel %vm369, %v1144, 0
      %v1239 = vsel %vm369, %v1176, 0
      %1241 = vmatpush.msra.mxu0 0.0
      %1242 = vmatpush.msra.mxu0 0.0
      %1243 = vmatpush.msra.mxu0 0.0
      %1244 = vmatpush.msra.mxu0 0.0
      %1245 = vmatpush.msra.mxu0 0.0
      %1246 = vmatpush.msra.mxu0 0.0
      %1247 = vmatpush.msra.mxu0 0.0
      %1248 = vmatpush.msra.mxu0 0.0
      %1249 = vmatpush.msra.mxu0 0.0
      %1250 = vmatpush.msra.mxu0 0.0
      %1251 = vmatpush.msra.mxu0 0.0
      %1252 = vmatpush.msra.mxu0 0.0
      %1253 = vmatpush.msra.mxu0 0.0
      %1254 = vmatpush.msra.mxu0 0.0
      %1255 = vmatpush.msra.mxu0 0.0
      %1256 = vmatpush.msra.mxu0 %v1192
      %1257 = vmatmul.f32.gmra.mxu0 %v1194
      %v1258 = vpop.f32.mrf.mxu0
      %v1259 = vadd.f32 0.0, %v1258
      %1260 = vmatmul.f32.gmra.mxu0 %v1197
      %v1261 = vpop.f32.mrf.mxu0
      %v1262 = vadd.f32 0.0, %v1261
      %1263 = vmatmul.f32.gmra.mxu0 %v1200
      %v1264 = vpop.f32.mrf.mxu0
      %v1265 = vadd.f32 0.0, %v1264
      %1266 = vmatmul.f32.gmra.mxu0 %v1203
      %v1267 = vpop.f32.mrf.mxu0
      %v1268 = vadd.f32 0.0, %v1267
      %1269 = vmatmul.f32.gmra.mxu0 %v1206
      %v1270 = vpop.f32.mrf.mxu0
      %v1271 = vadd.f32 0.0, %v1270
      %1272 = vmatmul.f32.gmra.mxu0 %v1209
      %v1273 = vpop.f32.mrf.mxu0
      %v1274 = vadd.f32 0.0, %v1273
      %1275 = vmatmul.f32.gmra.mxu0 %v1212
      %v1276 = vpop.f32.mrf.mxu0
      %v1277 = vadd.f32 0.0, %v1276
      %1278 = vmatmul.f32.gmra.mxu0 %v1215
      %v1279 = vpop.f32.mrf.mxu0
      %v1280 = vadd.f32 0.0, %v1279
      %1281 = vmatmul.f32.gmra.mxu0 %v1218
      %v1282 = vpop.f32.mrf.mxu0
      %v1283 = vadd.f32 0.0, %v1282
      %1284 = vmatmul.f32.gmra.mxu0 %v1221
      %v1285 = vpop.f32.mrf.mxu0
      %v1286 = vadd.f32 0.0, %v1285
      %1287 = vmatmul.f32.gmra.mxu0 %v1224
      %v1288 = vpop.f32.mrf.mxu0
      %v1289 = vadd.f32 0.0, %v1288
      %1290 = vmatmul.f32.gmra.mxu0 %v1227
      %v1291 = vpop.f32.mrf.mxu0
      %v1292 = vadd.f32 0.0, %v1291
      %1293 = vmatmul.f32.gmra.mxu0 %v1230
      %v1294 = vpop.f32.mrf.mxu0
      %v1295 = vadd.f32 0.0, %v1294
      %1296 = vmatmul.f32.gmra.mxu0 %v1233
      %v1297 = vpop.f32.mrf.mxu0
      %v1298 = vadd.f32 0.0, %v1297
      %1299 = vmatmul.f32.gmra.mxu0 %v1236
      %v1300 = vpop.f32.mrf.mxu0
      %v1301 = vadd.f32 0.0, %v1300
      %1302 = vmatmul.f32.gmra.mxu0 %v1239
      %v1303 = vpop.f32.mrf.mxu0
      %v1304 = vadd.f32 0.0, %v1303
      %1305 = vdwg.mxu0
      %1306 = vxpose.xlu0.b32.start [1/16] %v1259, 128
      %1307 = vxpose.xlu0.b32.cont [2/16] 0.0, 128
      %1308 = vxpose.xlu0.b32.cont [3/16] 0.0, 128
      %1309 = vxpose.xlu0.b32.cont [4/16] 0.0, 128
      %1310 = vxpose.xlu0.b32.cont [5/16] 0.0, 128
      %1311 = vxpose.xlu0.b32.cont [6/16] 0.0, 128
      %1312 = vxpose.xlu0.b32.cont [7/16] 0.0, 128
      %1313 = vxpose.xlu0.b32.cont [8/16] 0.0, 128
      %1314 = vxpose.xlu0.b32.cont [9/16] 0.0, 128
      %1315 = vxpose.xlu0.b32.cont [10/16] 0.0, 128
      %1316 = vxpose.xlu0.b32.cont [11/16] 0.0, 128
      %1317 = vxpose.xlu0.b32.cont [12/16] 0.0, 128
      %1318 = vxpose.xlu0.b32.cont [13/16] 0.0, 128
      %1319 = vxpose.xlu0.b32.cont [14/16] 0.0, 128
      %1320 = vxpose.xlu0.b32.cont [15/16] 0.0, 128
      %1321 = vxpose.xlu0.b32.end [16/16] 0.0, 128
      %v1322 = vpop.trf.xlu0
      %v1323 = vpop.trf.xlu0
      %v1324 = vpop.trf.xlu0
      %v1325 = vpop.trf.xlu0
      %v1326 = vpop.trf.xlu0
      %v1327 = vpop.trf.xlu0
      %v1328 = vpop.trf.xlu0
      %v1329 = vpop.trf.xlu0
      %v1330 = vpop.trf.xlu0
      %v1331 = vpop.trf.xlu0
      %v1332 = vpop.trf.xlu0
      %v1333 = vpop.trf.xlu0
      %v1334 = vpop.trf.xlu0
      %v1335 = vpop.trf.xlu0
      %v1336 = vpop.trf.xlu0
      %v1337 = vpop.trf.xlu0
      %1338 = vxpose.xlu0.b32.start [1/16] %v1262, 128
      %1339 = vxpose.xlu0.b32.cont [2/16] 0.0, 128
      %1340 = vxpose.xlu0.b32.cont [3/16] 0.0, 128
      %1341 = vxpose.xlu0.b32.cont [4/16] 0.0, 128
      %1342 = vxpose.xlu0.b32.cont [5/16] 0.0, 128
      %1343 = vxpose.xlu0.b32.cont [6/16] 0.0, 128
      %1344 = vxpose.xlu0.b32.cont [7/16] 0.0, 128
      %1345 = vxpose.xlu0.b32.cont [8/16] 0.0, 128
      %1346 = vxpose.xlu0.b32.cont [9/16] 0.0, 128
      %1347 = vxpose.xlu0.b32.cont [10/16] 0.0, 128
      %1348 = vxpose.xlu0.b32.cont [11/16] 0.0, 128
      %1349 = vxpose.xlu0.b32.cont [12/16] 0.0, 128
      %1350 = vxpose.xlu0.b32.cont [13/16] 0.0, 128
      %1351 = vxpose.xlu0.b32.cont [14/16] 0.0, 128
      %1352 = vxpose.xlu0.b32.cont [15/16] 0.0, 128
      %1353 = vxpose.xlu0.b32.end [16/16] 0.0, 128
      %v1354 = vpop.trf.xlu0
      %v1355 = vpop.trf.xlu0
      %v1356 = vpop.trf.xlu0
      %v1357 = vpop.trf.xlu0
      %v1358 = vpop.trf.xlu0
      %v1359 = vpop.trf.xlu0
      %v1360 = vpop.trf.xlu0
      %v1361 = vpop.trf.xlu0
      %v1362 = vpop.trf.xlu0
      %v1363 = vpop.trf.xlu0
      %v1364 = vpop.trf.xlu0
      %v1365 = vpop.trf.xlu0
      %v1366 = vpop.trf.xlu0
      %v1367 = vpop.trf.xlu0
      %v1368 = vpop.trf.xlu0
      %v1369 = vpop.trf.xlu0
      %1370 = vxpose.xlu0.b32.start [1/16] %v1265, 128
      %1371 = vxpose.xlu0.b32.cont [2/16] 0.0, 128
      %1372 = vxpose.xlu0.b32.cont [3/16] 0.0, 128
      %1373 = vxpose.xlu0.b32.cont [4/16] 0.0, 128
      %1374 = vxpose.xlu0.b32.cont [5/16] 0.0, 128
      %1375 = vxpose.xlu0.b32.cont [6/16] 0.0, 128
      %1376 = vxpose.xlu0.b32.cont [7/16] 0.0, 128
      %1377 = vxpose.xlu0.b32.cont [8/16] 0.0, 128
      %1378 = vxpose.xlu0.b32.cont [9/16] 0.0, 128
      %1379 = vxpose.xlu0.b32.cont [10/16] 0.0, 128
      %1380 = vxpose.xlu0.b32.cont [11/16] 0.0, 128
      %1381 = vxpose.xlu0.b32.cont [12/16] 0.0, 128
      %1382 = vxpose.xlu0.b32.cont [13/16] 0.0, 128
      %1383 = vxpose.xlu0.b32.cont [14/16] 0.0, 128
      %1384 = vxpose.xlu0.b32.cont [15/16] 0.0, 128
      %1385 = vxpose.xlu0.b32.end [16/16] 0.0, 128
      %v1386 = vpop.trf.xlu0
      %v1387 = vpop.trf.xlu0
      %v1388 = vpop.trf.xlu0
      %v1389 = vpop.trf.xlu0
      %v1390 = vpop.trf.xlu0
      %v1391 = vpop.trf.xlu0
      %v1392 = vpop.trf.xlu0
      %v1393 = vpop.trf.xlu0
      %v1394 = vpop.trf.xlu0
      %v1395 = vpop.trf.xlu0
      %v1396 = vpop.trf.xlu0
      %v1397 = vpop.trf.xlu0
      %v1398 = vpop.trf.xlu0
      %v1399 = vpop.trf.xlu0
      %v1400 = vpop.trf.xlu0
      %v1401 = vpop.trf.xlu0
      %1402 = vxpose.xlu0.b32.start [1/16] %v1268, 128
      %1403 = vxpose.xlu0.b32.cont [2/16] 0.0, 128
      %1404 = vxpose.xlu0.b32.cont [3/16] 0.0, 128
      %1405 = vxpose.xlu0.b32.cont [4/16] 0.0, 128
      %1406 = vxpose.xlu0.b32.cont [5/16] 0.0, 128
      %1407 = vxpose.xlu0.b32.cont [6/16] 0.0, 128
      %1408 = vxpose.xlu0.b32.cont [7/16] 0.0, 128
      %1409 = vxpose.xlu0.b32.cont [8/16] 0.0, 128
      %1410 = vxpose.xlu0.b32.cont [9/16] 0.0, 128
      %1411 = vxpose.xlu0.b32.cont [10/16] 0.0, 128
      %1412 = vxpose.xlu0.b32.cont [11/16] 0.0, 128
      %1413 = vxpose.xlu0.b32.cont [12/16] 0.0, 128
      %1414 = vxpose.xlu0.b32.cont [13/16] 0.0, 128
      %1415 = vxpose.xlu0.b32.cont [14/16] 0.0, 128
      %1416 = vxpose.xlu0.b32.cont [15/16] 0.0, 128
      %1417 = vxpose.xlu0.b32.end [16/16] 0.0, 128
      %v1418 = vpop.trf.xlu0
      %v1419 = vpop.trf.xlu0
      %v1420 = vpop.trf.xlu0
      %v1421 = vpop.trf.xlu0
      %v1422 = vpop.trf.xlu0
      %v1423 = vpop.trf.xlu0
      %v1424 = vpop.trf.xlu0
      %v1425 = vpop.trf.xlu0
      %v1426 = vpop.trf.xlu0
      %v1427 = vpop.trf.xlu0
      %v1428 = vpop.trf.xlu0
      %v1429 = vpop.trf.xlu0
      %v1430 = vpop.trf.xlu0
      %v1431 = vpop.trf.xlu0
      %v1432 = vpop.trf.xlu0
      %v1433 = vpop.trf.xlu0
      %1434 = vxpose.xlu0.b32.start [1/16] %v1271, 128
      %1435 = vxpose.xlu0.b32.cont [2/16] 0.0, 128
      %1436 = vxpose.xlu0.b32.cont [3/16] 0.0, 128
      %1437 = vxpose.xlu0.b32.cont [4/16] 0.0, 128
      %1438 = vxpose.xlu0.b32.cont [5/16] 0.0, 128
      %1439 = vxpose.xlu0.b32.cont [6/16] 0.0, 128
      %1440 = vxpose.xlu0.b32.cont [7/16] 0.0, 128
      %1441 = vxpose.xlu0.b32.cont [8/16] 0.0, 128
      %1442 = vxpose.xlu0.b32.cont [9/16] 0.0, 128
      %1443 = vxpose.xlu0.b32.cont [10/16] 0.0, 128
      %1444 = vxpose.xlu0.b32.cont [11/16] 0.0, 128
      %1445 = vxpose.xlu0.b32.cont [12/16] 0.0, 128
      %1446 = vxpose.xlu0.b32.cont [13/16] 0.0, 128
      %1447 = vxpose.xlu0.b32.cont [14/16] 0.0, 128
      %1448 = vxpose.xlu0.b32.cont [15/16] 0.0, 128
      %1449 = vxpose.xlu0.b32.end [16/16] 0.0, 128
      %v1450 = vpop.trf.xlu0
      %v1451 = vpop.trf.xlu0
      %v1452 = vpop.trf.xlu0
      %v1453 = vpop.trf.xlu0
      %v1454 = vpop.trf.xlu0
      %v1455 = vpop.trf.xlu0
      %v1456 = vpop.trf.xlu0
      %v1457 = vpop.trf.xlu0
      %v1458 = vpop.trf.xlu0
      %v1459 = vpop.trf.xlu0
      %v1460 = vpop.trf.xlu0
      %v1461 = vpop.trf.xlu0
      %v1462 = vpop.trf.xlu0
      %v1463 = vpop.trf.xlu0
      %v1464 = vpop.trf.xlu0
      %v1465 = vpop.trf.xlu0
      %1466 = vxpose.xlu0.b32.start [1/16] %v1274, 128
      %1467 = vxpose.xlu0.b32.cont [2/16] 0.0, 128
      %1468 = vxpose.xlu0.b32.cont [3/16] 0.0, 128
      %1469 = vxpose.xlu0.b32.cont [4/16] 0.0, 128
      %1470 = vxpose.xlu0.b32.cont [5/16] 0.0, 128
      %1471 = vxpose.xlu0.b32.cont [6/16] 0.0, 128
      %1472 = vxpose.xlu0.b32.cont [7/16] 0.0, 128
      %1473 = vxpose.xlu0.b32.cont [8/16] 0.0, 128
      %1474 = vxpose.xlu0.b32.cont [9/16] 0.0, 128
      %1475 = vxpose.xlu0.b32.cont [10/16] 0.0, 128
      %1476 = vxpose.xlu0.b32.cont [11/16] 0.0, 128
      %1477 = vxpose.xlu0.b32.cont [12/16] 0.0, 128
      %1478 = vxpose.xlu0.b32.cont [13/16] 0.0, 128
      %1479 = vxpose.xlu0.b32.cont [14/16] 0.0, 128
      %1480 = vxpose.xlu0.b32.cont [15/16] 0.0, 128
      %1481 = vxpose.xlu0.b32.end [16/16] 0.0, 128
      %v1482 = vpop.trf.xlu0
      %v1483 = vpop.trf.xlu0
      %v1484 = vpop.trf.xlu0
      %v1485 = vpop.trf.xlu0
      %v1486 = vpop.trf.xlu0
      %v1487 = vpop.trf.xlu0
      %v1488 = vpop.trf.xlu0
      %v1489 = vpop.trf.xlu0
      %v1490 = vpop.trf.xlu0
      %v1491 = vpop.trf.xlu0
      %v1492 = vpop.trf.xlu0
      %v1493 = vpop.trf.xlu0
      %v1494 = vpop.trf.xlu0
      %v1495 = vpop.trf.xlu0
      %v1496 = vpop.trf.xlu0
      %v1497 = vpop.trf.xlu0
      %1498 = vxpose.xlu0.b32.start [1/16] %v1277, 128
      %1499 = vxpose.xlu0.b32.cont [2/16] 0.0, 128
      %1500 = vxpose.xlu0.b32.cont [3/16] 0.0, 128
      %1501 = vxpose.xlu0.b32.cont [4/16] 0.0, 128
      %1502 = vxpose.xlu0.b32.cont [5/16] 0.0, 128
      %1503 = vxpose.xlu0.b32.cont [6/16] 0.0, 128
      %1504 = vxpose.xlu0.b32.cont [7/16] 0.0, 128
      %1505 = vxpose.xlu0.b32.cont [8/16] 0.0, 128
      %1506 = vxpose.xlu0.b32.cont [9/16] 0.0, 128
      %1507 = vxpose.xlu0.b32.cont [10/16] 0.0, 128
      %1508 = vxpose.xlu0.b32.cont [11/16] 0.0, 128
      %1509 = vxpose.xlu0.b32.cont [12/16] 0.0, 128
      %1510 = vxpose.xlu0.b32.cont [13/16] 0.0, 128
      %1511 = vxpose.xlu0.b32.cont [14/16] 0.0, 128
      %1512 = vxpose.xlu0.b32.cont [15/16] 0.0, 128
      %1513 = vxpose.xlu0.b32.end [16/16] 0.0, 128
      %v1514 = vpop.trf.xlu0
      %v1515 = vpop.trf.xlu0
      %v1516 = vpop.trf.xlu0
      %v1517 = vpop.trf.xlu0
      %v1518 = vpop.trf.xlu0
      %v1519 = vpop.trf.xlu0
      %v1520 = vpop.trf.xlu0
      %v1521 = vpop.trf.xlu0
      %v1522 = vpop.trf.xlu0
      %v1523 = vpop.trf.xlu0
      %v1524 = vpop.trf.xlu0
      %v1525 = vpop.trf.xlu0
      %v1526 = vpop.trf.xlu0
      %v1527 = vpop.trf.xlu0
      %v1528 = vpop.trf.xlu0
      %v1529 = vpop.trf.xlu0
      %1530 = vxpose.xlu0.b32.start [1/16] %v1280, 128
      %1531 = vxpose.xlu0.b32.cont [2/16] 0.0, 128
      %1532 = vxpose.xlu0.b32.cont [3/16] 0.0, 128
      %1533 = vxpose.xlu0.b32.cont [4/16] 0.0, 128
      %1534 = vxpose.xlu0.b32.cont [5/16] 0.0, 128
      %1535 = vxpose.xlu0.b32.cont [6/16] 0.0, 128
      %1536 = vxpose.xlu0.b32.cont [7/16] 0.0, 128
      %1537 = vxpose.xlu0.b32.cont [8/16] 0.0, 128
      %1538 = vxpose.xlu0.b32.cont [9/16] 0.0, 128
      %1539 = vxpose.xlu0.b32.cont [10/16] 0.0, 128
      %1540 = vxpose.xlu0.b32.cont [11/16] 0.0, 128
      %1541 = vxpose.xlu0.b32.cont [12/16] 0.0, 128
      %1542 = vxpose.xlu0.b32.cont [13/16] 0.0, 128
      %1543 = vxpose.xlu0.b32.cont [14/16] 0.0, 128
      %1544 = vxpose.xlu0.b32.cont [15/16] 0.0, 128
      %1545 = vxpose.xlu0.b32.end [16/16] 0.0, 128
      %v1546 = vpop.trf.xlu0
      %v1547 = vpop.trf.xlu0
      %v1548 = vpop.trf.xlu0
      %v1549 = vpop.trf.xlu0
      %v1550 = vpop.trf.xlu0
      %v1551 = vpop.trf.xlu0
      %v1552 = vpop.trf.xlu0
      %v1553 = vpop.trf.xlu0
      %v1554 = vpop.trf.xlu0
      %v1555 = vpop.trf.xlu0
      %v1556 = vpop.trf.xlu0
      %v1557 = vpop.trf.xlu0
      %v1558 = vpop.trf.xlu0
      %v1559 = vpop.trf.xlu0
      %v1560 = vpop.trf.xlu0
      %v1561 = vpop.trf.xlu0
      %1562 = vxpose.xlu0.b32.start [1/16] %v1283, 128
      %1563 = vxpose.xlu0.b32.cont [2/16] 0.0, 128
      %1564 = vxpose.xlu0.b32.cont [3/16] 0.0, 128
      %1565 = vxpose.xlu0.b32.cont [4/16] 0.0, 128
      %1566 = vxpose.xlu0.b32.cont [5/16] 0.0, 128
      %1567 = vxpose.xlu0.b32.cont [6/16] 0.0, 128
      %1568 = vxpose.xlu0.b32.cont [7/16] 0.0, 128
      %1569 = vxpose.xlu0.b32.cont [8/16] 0.0, 128
      %1570 = vxpose.xlu0.b32.cont [9/16] 0.0, 128
      %1571 = vxpose.xlu0.b32.cont [10/16] 0.0, 128
      %1572 = vxpose.xlu0.b32.cont [11/16] 0.0, 128
      %1573 = vxpose.xlu0.b32.cont [12/16] 0.0, 128
      %1574 = vxpose.xlu0.b32.cont [13/16] 0.0, 128
      %1575 = vxpose.xlu0.b32.cont [14/16] 0.0, 128
      %1576 = vxpose.xlu0.b32.cont [15/16] 0.0, 128
      %1577 = vxpose.xlu0.b32.end [16/16] 0.0, 128
      %v1578 = vpop.trf.xlu0
      %v1579 = vpop.trf.xlu0
      %v1580 = vpop.trf.xlu0
      %v1581 = vpop.trf.xlu0
      %v1582 = vpop.trf.xlu0
      %v1583 = vpop.trf.xlu0
      %v1584 = vpop.trf.xlu0
      %v1585 = vpop.trf.xlu0
      %v1586 = vpop.trf.xlu0
      %v1587 = vpop.trf.xlu0
      %v1588 = vpop.trf.xlu0
      %v1589 = vpop.trf.xlu0
      %v1590 = vpop.trf.xlu0
      %v1591 = vpop.trf.xlu0
      %v1592 = vpop.trf.xlu0
      %v1593 = vpop.trf.xlu0
      %1594 = vxpose.xlu0.b32.start [1/16] %v1286, 128
      %1595 = vxpose.xlu0.b32.cont [2/16] 0.0, 128
      %1596 = vxpose.xlu0.b32.cont [3/16] 0.0, 128
      %1597 = vxpose.xlu0.b32.cont [4/16] 0.0, 128
      %1598 = vxpose.xlu0.b32.cont [5/16] 0.0, 128
      %1599 = vxpose.xlu0.b32.cont [6/16] 0.0, 128
      %1600 = vxpose.xlu0.b32.cont [7/16] 0.0, 128
      %1601 = vxpose.xlu0.b32.cont [8/16] 0.0, 128
      %1602 = vxpose.xlu0.b32.cont [9/16] 0.0, 128
      %1603 = vxpose.xlu0.b32.cont [10/16] 0.0, 128
      %1604 = vxpose.xlu0.b32.cont [11/16] 0.0, 128
      %1605 = vxpose.xlu0.b32.cont [12/16] 0.0, 128
      %1606 = vxpose.xlu0.b32.cont [13/16] 0.0, 128
      %1607 = vxpose.xlu0.b32.cont [14/16] 0.0, 128
      %1608 = vxpose.xlu0.b32.cont [15/16] 0.0, 128
      %1609 = vxpose.xlu0.b32.end [16/16] 0.0, 128
      %v1610 = vpop.trf.xlu0
      %v1611 = vpop.trf.xlu0
      %v1612 = vpop.trf.xlu0
      %v1613 = vpop.trf.xlu0
      %v1614 = vpop.trf.xlu0
      %v1615 = vpop.trf.xlu0
      %v1616 = vpop.trf.xlu0
      %v1617 = vpop.trf.xlu0
      %v1618 = vpop.trf.xlu0
      %v1619 = vpop.trf.xlu0
      %v1620 = vpop.trf.xlu0
      %v1621 = vpop.trf.xlu0
      %v1622 = vpop.trf.xlu0
      %v1623 = vpop.trf.xlu0
      %v1624 = vpop.trf.xlu0
      %v1625 = vpop.trf.xlu0
      %1626 = vxpose.xlu0.b32.start [1/16] %v1289, 128
      %1627 = vxpose.xlu0.b32.cont [2/16] 0.0, 128
      %1628 = vxpose.xlu0.b32.cont [3/16] 0.0, 128
      %1629 = vxpose.xlu0.b32.cont [4/16] 0.0, 128
      %1630 = vxpose.xlu0.b32.cont [5/16] 0.0, 128
      %1631 = vxpose.xlu0.b32.cont [6/16] 0.0, 128
      %1632 = vxpose.xlu0.b32.cont [7/16] 0.0, 128
      %1633 = vxpose.xlu0.b32.cont [8/16] 0.0, 128
      %1634 = vxpose.xlu0.b32.cont [9/16] 0.0, 128
      %1635 = vxpose.xlu0.b32.cont [10/16] 0.0, 128
      %1636 = vxpose.xlu0.b32.cont [11/16] 0.0, 128
      %1637 = vxpose.xlu0.b32.cont [12/16] 0.0, 128
      %1638 = vxpose.xlu0.b32.cont [13/16] 0.0, 128
      %1639 = vxpose.xlu0.b32.cont [14/16] 0.0, 128
      %1640 = vxpose.xlu0.b32.cont [15/16] 0.0, 128
      %1641 = vxpose.xlu0.b32.end [16/16] 0.0, 128
      %v1642 = vpop.trf.xlu0
      %v1643 = vpop.trf.xlu0
      %v1644 = vpop.trf.xlu0
      %v1645 = vpop.trf.xlu0
      %v1646 = vpop.trf.xlu0
      %v1647 = vpop.trf.xlu0
      %v1648 = vpop.trf.xlu0
      %v1649 = vpop.trf.xlu0
      %v1650 = vpop.trf.xlu0
      %v1651 = vpop.trf.xlu0
      %v1652 = vpop.trf.xlu0
      %v1653 = vpop.trf.xlu0
      %v1654 = vpop.trf.xlu0
      %v1655 = vpop.trf.xlu0
      %v1656 = vpop.trf.xlu0
      %v1657 = vpop.trf.xlu0
      %1658 = vxpose.xlu0.b32.start [1/16] %v1292, 128
      %1659 = vxpose.xlu0.b32.cont [2/16] 0.0, 128
      %1660 = vxpose.xlu0.b32.cont [3/16] 0.0, 128
      %1661 = vxpose.xlu0.b32.cont [4/16] 0.0, 128
      %1662 = vxpose.xlu0.b32.cont [5/16] 0.0, 128
      %1663 = vxpose.xlu0.b32.cont [6/16] 0.0, 128
      %1664 = vxpose.xlu0.b32.cont [7/16] 0.0, 128
      %1665 = vxpose.xlu0.b32.cont [8/16] 0.0, 128
      %1666 = vxpose.xlu0.b32.cont [9/16] 0.0, 128
      %1667 = vxpose.xlu0.b32.cont [10/16] 0.0, 128
      %1668 = vxpose.xlu0.b32.cont [11/16] 0.0, 128
      %1669 = vxpose.xlu0.b32.cont [12/16] 0.0, 128
      %1670 = vxpose.xlu0.b32.cont [13/16] 0.0, 128
      %1671 = vxpose.xlu0.b32.cont [14/16] 0.0, 128
      %1672 = vxpose.xlu0.b32.cont [15/16] 0.0, 128
      %1673 = vxpose.xlu0.b32.end [16/16] 0.0, 128
      %v1674 = vpop.trf.xlu0
      %v1675 = vpop.trf.xlu0
      %v1676 = vpop.trf.xlu0
      %v1677 = vpop.trf.xlu0
      %v1678 = vpop.trf.xlu0
      %v1679 = vpop.trf.xlu0
      %v1680 = vpop.trf.xlu0
      %v1681 = vpop.trf.xlu0
      %v1682 = vpop.trf.xlu0
      %v1683 = vpop.trf.xlu0
      %v1684 = vpop.trf.xlu0
      %v1685 = vpop.trf.xlu0
      %v1686 = vpop.trf.xlu0
      %v1687 = vpop.trf.xlu0
      %v1688 = vpop.trf.xlu0
      %v1689 = vpop.trf.xlu0
      %1690 = vxpose.xlu0.b32.start [1/16] %v1295, 128
      %1691 = vxpose.xlu0.b32.cont [2/16] 0.0, 128
      %1692 = vxpose.xlu0.b32.cont [3/16] 0.0, 128
      %1693 = vxpose.xlu0.b32.cont [4/16] 0.0, 128
      %1694 = vxpose.xlu0.b32.cont [5/16] 0.0, 128
      %1695 = vxpose.xlu0.b32.cont [6/16] 0.0, 128
      %1696 = vxpose.xlu0.b32.cont [7/16] 0.0, 128
      %1697 = vxpose.xlu0.b32.cont [8/16] 0.0, 128
      %1698 = vxpose.xlu0.b32.cont [9/16] 0.0, 128
      %1699 = vxpose.xlu0.b32.cont [10/16] 0.0, 128
      %1700 = vxpose.xlu0.b32.cont [11/16] 0.0, 128
      %1701 = vxpose.xlu0.b32.cont [12/16] 0.0, 128
      %1702 = vxpose.xlu0.b32.cont [13/16] 0.0, 128
      %1703 = vxpose.xlu0.b32.cont [14/16] 0.0, 128
      %1704 = vxpose.xlu0.b32.cont [15/16] 0.0, 128
      %1705 = vxpose.xlu0.b32.end [16/16] 0.0, 128
      %v1706 = vpop.trf.xlu0
      %v1707 = vpop.trf.xlu0
      %v1708 = vpop.trf.xlu0
      %v1709 = vpop.trf.xlu0
      %v1710 = vpop.trf.xlu0
      %v1711 = vpop.trf.xlu0
      %v1712 = vpop.trf.xlu0
      %v1713 = vpop.trf.xlu0
      %v1714 = vpop.trf.xlu0
      %v1715 = vpop.trf.xlu0
      %v1716 = vpop.trf.xlu0
      %v1717 = vpop.trf.xlu0
      %v1718 = vpop.trf.xlu0
      %v1719 = vpop.trf.xlu0
      %v1720 = vpop.trf.xlu0
      %v1721 = vpop.trf.xlu0
      %1722 = vxpose.xlu0.b32.start [1/16] %v1298, 128
      %1723 = vxpose.xlu0.b32.cont [2/16] 0.0, 128
      %1724 = vxpose.xlu0.b32.cont [3/16] 0.0, 128
      %1725 = vxpose.xlu0.b32.cont [4/16] 0.0, 128
      %1726 = vxpose.xlu0.b32.cont [5/16] 0.0, 128
      %1727 = vxpose.xlu0.b32.cont [6/16] 0.0, 128
      %1728 = vxpose.xlu0.b32.cont [7/16] 0.0, 128
      %1729 = vxpose.xlu0.b32.cont [8/16] 0.0, 128
      %1730 = vxpose.xlu0.b32.cont [9/16] 0.0, 128
      %1731 = vxpose.xlu0.b32.cont [10/16] 0.0, 128
      %1732 = vxpose.xlu0.b32.cont [11/16] 0.0, 128
      %1733 = vxpose.xlu0.b32.cont [12/16] 0.0, 128
      %1734 = vxpose.xlu0.b32.cont [13/16] 0.0, 128
      %1735 = vxpose.xlu0.b32.cont [14/16] 0.0, 128
      %1736 = vxpose.xlu0.b32.cont [15/16] 0.0, 128
      %1737 = vxpose.xlu0.b32.end [16/16] 0.0, 128
      %v1738 = vpop.trf.xlu0
      %v1739 = vpop.trf.xlu0
      %v1740 = vpop.trf.xlu0
      %v1741 = vpop.trf.xlu0
      %v1742 = vpop.trf.xlu0
      %v1743 = vpop.trf.xlu0
      %v1744 = vpop.trf.xlu0
      %v1745 = vpop.trf.xlu0
      %v1746 = vpop.trf.xlu0
      %v1747 = vpop.trf.xlu0
      %v1748 = vpop.trf.xlu0
      %v1749 = vpop.trf.xlu0
      %v1750 = vpop.trf.xlu0
      %v1751 = vpop.trf.xlu0
      %v1752 = vpop.trf.xlu0
      %v1753 = vpop.trf.xlu0
      %1754 = vxpose.xlu0.b32.start [1/16] %v1301, 128
      %1755 = vxpose.xlu0.b32.cont [2/16] 0.0, 128
      %1756 = vxpose.xlu0.b32.cont [3/16] 0.0, 128
      %1757 = vxpose.xlu0.b32.cont [4/16] 0.0, 128
      %1758 = vxpose.xlu0.b32.cont [5/16] 0.0, 128
      %1759 = vxpose.xlu0.b32.cont [6/16] 0.0, 128
      %1760 = vxpose.xlu0.b32.cont [7/16] 0.0, 128
      %1761 = vxpose.xlu0.b32.cont [8/16] 0.0, 128
      %1762 = vxpose.xlu0.b32.cont [9/16] 0.0, 128
      %1763 = vxpose.xlu0.b32.cont [10/16] 0.0, 128
      %1764 = vxpose.xlu0.b32.cont [11/16] 0.0, 128
      %1765 = vxpose.xlu0.b32.cont [12/16] 0.0, 128
      %1766 = vxpose.xlu0.b32.cont [13/16] 0.0, 128
      %1767 = vxpose.xlu0.b32.cont [14/16] 0.0, 128
      %1768 = vxpose.xlu0.b32.cont [15/16] 0.0, 128
      %1769 = vxpose.xlu0.b32.end [16/16] 0.0, 128
      %v1770 = vpop.trf.xlu0
      %v1771 = vpop.trf.xlu0
      %v1772 = vpop.trf.xlu0
      %v1773 = vpop.trf.xlu0
      %v1774 = vpop.trf.xlu0
      %v1775 = vpop.trf.xlu0
      %v1776 = vpop.trf.xlu0
      %v1777 = vpop.trf.xlu0
      %v1778 = vpop.trf.xlu0
      %v1779 = vpop.trf.xlu0
      %v1780 = vpop.trf.xlu0
      %v1781 = vpop.trf.xlu0
      %v1782 = vpop.trf.xlu0
      %v1783 = vpop.trf.xlu0
      %v1784 = vpop.trf.xlu0
      %v1785 = vpop.trf.xlu0
      %1786 = vxpose.xlu0.b32.start [1/16] %v1304, 128
      %1787 = vxpose.xlu0.b32.cont [2/16] 0.0, 128
      %1788 = vxpose.xlu0.b32.cont [3/16] 0.0, 128
      %1789 = vxpose.xlu0.b32.cont [4/16] 0.0, 128
      %1790 = vxpose.xlu0.b32.cont [5/16] 0.0, 128
      %1791 = vxpose.xlu0.b32.cont [6/16] 0.0, 128
      %1792 = vxpose.xlu0.b32.cont [7/16] 0.0, 128
      %1793 = vxpose.xlu0.b32.cont [8/16] 0.0, 128
      %1794 = vxpose.xlu0.b32.cont [9/16] 0.0, 128
      %1795 = vxpose.xlu0.b32.cont [10/16] 0.0, 128
      %1796 = vxpose.xlu0.b32.cont [11/16] 0.0, 128
      %1797 = vxpose.xlu0.b32.cont [12/16] 0.0, 128
      %1798 = vxpose.xlu0.b32.cont [13/16] 0.0, 128
      %1799 = vxpose.xlu0.b32.cont [14/16] 0.0, 128
      %1800 = vxpose.xlu0.b32.cont [15/16] 0.0, 128
      %1801 = vxpose.xlu0.b32.end [16/16] 0.0, 128
      %v1802 = vpop.trf.xlu0
      %v1803 = vpop.trf.xlu0
      %v1804 = vpop.trf.xlu0
      %v1805 = vpop.trf.xlu0
      %v1806 = vpop.trf.xlu0
      %v1807 = vpop.trf.xlu0
      %v1808 = vpop.trf.xlu0
      %v1809 = vpop.trf.xlu0
      %v1810 = vpop.trf.xlu0
      %v1811 = vpop.trf.xlu0
      %v1812 = vpop.trf.xlu0
      %v1813 = vpop.trf.xlu0
      %v1814 = vpop.trf.xlu0
      %v1815 = vpop.trf.xlu0
      %v1816 = vpop.trf.xlu0
      %v1817 = vpop.trf.xlu0
      %v1818 = vld [vmem:[%s212] sm:$0xff]
      %v1819 = vld [vmem:[%s212 + $0x8] sm:$0xff]
      %v1820 = vld [vmem:[%s212 + $0x10] sm:$0xff]
      %v1821 = vld [vmem:[%s212 + $0x18] sm:$0xff]
      %v1822 = vld [vmem:[%s212 + $0x20] sm:$0xff]
      %v1823 = vld [vmem:[%s212 + $0x28] sm:$0xff]
      %v1824 = vld [vmem:[%s212 + $0x30] sm:$0xff]
      %v1825 = vld [vmem:[%s212 + $0x38] sm:$0xff]
      %v1826 = vld [vmem:[%s212 + $0x40] sm:$0xff]
      %v1827 = vld [vmem:[%s212 + $0x48] sm:$0xff]
      %v1828 = vld [vmem:[%s212 + $0x50] sm:$0xff]
      %v1829 = vld [vmem:[%s212 + $0x58] sm:$0xff]
      %v1830 = vld [vmem:[%s212 + $0x60] sm:$0xff]
      %v1831 = vld [vmem:[%s212 + $0x68] sm:$0xff]
      %v1832 = vld [vmem:[%s212 + $0x70] sm:$0xff]
      %v1833 = vld [vmem:[%s212 + $0x78] sm:$0xff]
      %v1834 = vld [vmem:[%s212 + $0x80] sm:$0xff]
      %v1835 = vld [vmem:[%s212 + $0x88] sm:$0xff]
      %v1836 = vld [vmem:[%s212 + $0x90] sm:$0xff]
      %v1837 = vld [vmem:[%s212 + $0x98] sm:$0xff]
      %v1838 = vld [vmem:[%s212 + $0xa0] sm:$0xff]
      %v1839 = vld [vmem:[%s212 + $0xa8] sm:$0xff]
      %v1840 = vld [vmem:[%s212 + $0xb0] sm:$0xff]
      %v1841 = vld [vmem:[%s212 + $0xb8] sm:$0xff]
      %v1842 = vld [vmem:[%s212 + $0xc0] sm:$0xff]
      %v1843 = vld [vmem:[%s212 + $0xc8] sm:$0xff]
      %v1844 = vld [vmem:[%s212 + $0xd0] sm:$0xff]
      %v1845 = vld [vmem:[%s212 + $0xd8] sm:$0xff]
      %v1846 = vld [vmem:[%s212 + $0xe0] sm:$0xff]
      %v1847 = vld [vmem:[%s212 + $0xe8] sm:$0xff]
      %v1848 = vld [vmem:[%s212 + $0xf0] sm:$0xff]
      %v1849 = vld [vmem:[%s212 + $0xf8] sm:$0xff]
      %1882 = vrot.lane.b32.xlu0 %v1322, 8
      %v1883 = vpop.permute.xlu0 %1882
      %1884 = vrot.lane.b32.xlu0 %v1323, 8
      %v1885 = vpop.permute.xlu0 %1884
      %1886 = vrot.lane.b32.xlu0 %v1354, 8
      %v1887 = vpop.permute.xlu0 %1886
      %1888 = vrot.lane.b32.xlu0 %v1355, 8
      %v1889 = vpop.permute.xlu0 %1888
      %1890 = vrot.lane.b32.xlu0 %v1386, 8
      %v1891 = vpop.permute.xlu0 %1890
      %1892 = vrot.lane.b32.xlu0 %v1387, 8
      %v1893 = vpop.permute.xlu0 %1892
      %1894 = vrot.lane.b32.xlu0 %v1418, 8
      %v1895 = vpop.permute.xlu0 %1894
      %1896 = vrot.lane.b32.xlu0 %v1419, 8
      %v1897 = vpop.permute.xlu0 %1896
      %1898 = vrot.lane.b32.xlu0 %v1450, 8
      %v1899 = vpop.permute.xlu0 %1898
      %1900 = vrot.lane.b32.xlu0 %v1451, 8
      %v1901 = vpop.permute.xlu0 %1900
      %1902 = vrot.lane.b32.xlu0 %v1482, 8
      %v1903 = vpop.permute.xlu0 %1902
      %1904 = vrot.lane.b32.xlu0 %v1483, 8
      %v1905 = vpop.permute.xlu0 %1904
      %1906 = vrot.lane.b32.xlu0 %v1514, 8
      %v1907 = vpop.permute.xlu0 %1906
      %1908 = vrot.lane.b32.xlu0 %v1515, 8
      %v1909 = vpop.permute.xlu0 %1908
      %1910 = vrot.lane.b32.xlu0 %v1546, 8
      %v1911 = vpop.permute.xlu0 %1910
      %1912 = vrot.lane.b32.xlu0 %v1547, 8
      %v1913 = vpop.permute.xlu0 %1912
      %1914 = vrot.lane.b32.xlu0 %v1578, 8
      %v1915 = vpop.permute.xlu0 %1914
      %1916 = vrot.lane.b32.xlu0 %v1579, 8
      %v1917 = vpop.permute.xlu0 %1916
      %1918 = vrot.lane.b32.xlu0 %v1610, 8
      %v1919 = vpop.permute.xlu0 %1918
      %1920 = vrot.lane.b32.xlu0 %v1611, 8
      %v1921 = vpop.permute.xlu0 %1920
      %1922 = vrot.lane.b32.xlu0 %v1642, 8
      %v1923 = vpop.permute.xlu0 %1922
      %1924 = vrot.lane.b32.xlu0 %v1643, 8
      %v1925 = vpop.permute.xlu0 %1924
      %1926 = vrot.lane.b32.xlu0 %v1674, 8
      %v1927 = vpop.permute.xlu0 %1926
      %1928 = vrot.lane.b32.xlu0 %v1675, 8
      %v1929 = vpop.permute.xlu0 %1928
      %1930 = vrot.lane.b32.xlu0 %v1706, 8
      %v1931 = vpop.permute.xlu0 %1930
      %1932 = vrot.lane.b32.xlu0 %v1707, 8
      %v1933 = vpop.permute.xlu0 %1932
      %1934 = vrot.lane.b32.xlu0 %v1738, 8
      %v1935 = vpop.permute.xlu0 %1934
      %1936 = vrot.lane.b32.xlu0 %v1739, 8
      %v1937 = vpop.permute.xlu0 %1936
      %1938 = vrot.lane.b32.xlu0 %v1770, 8
      %v1939 = vpop.permute.xlu0 %1938
      %1940 = vrot.lane.b32.xlu0 %v1771, 8
      %v1941 = vpop.permute.xlu0 %1940
      %1942 = vrot.lane.b32.xlu0 %v1802, 8
      %v1943 = vpop.permute.xlu0 %1942
      %1944 = vrot.lane.b32.xlu0 %v1803, 8
      %v1945 = vpop.permute.xlu0 %1944
      %v1978 = vsel %vm369, %v1818, %v1883
      %v1979 = vsel %vm369, %v1819, %v1885
      %v1980 = vsel %vm369, %v1820, %v1887
      %v1981 = vsel %vm369, %v1821, %v1889
      %v1982 = vsel %vm369, %v1822, %v1891
      %v1983 = vsel %vm369, %v1823, %v1893
      %v1984 = vsel %vm369, %v1824, %v1895
      %v1985 = vsel %vm369, %v1825, %v1897
      %v1986 = vsel %vm369, %v1826, %v1899
      %v1987 = vsel %vm369, %v1827, %v1901
      %v1988 = vsel %vm369, %v1828, %v1903
      %v1989 = vsel %vm369, %v1829, %v1905
      %v1990 = vsel %vm369, %v1830, %v1907
      %v1991 = vsel %vm369, %v1831, %v1909
      %v1992 = vsel %vm369, %v1832, %v1911
      %v1993 = vsel %vm369, %v1833, %v1913
      %v1994 = vsel %vm369, %v1834, %v1915
      %v1995 = vsel %vm369, %v1835, %v1917
      %v1996 = vsel %vm369, %v1836, %v1919
      %v1997 = vsel %vm369, %v1837, %v1921
      %v1998 = vsel %vm369, %v1838, %v1923
      %v1999 = vsel %vm369, %v1839, %v1925
      %v2000 = vsel %vm369, %v1840, %v1927
      %v2001 = vsel %vm369, %v1841, %v1929
      %v2002 = vsel %vm369, %v1842, %v1931
      %v2003 = vsel %vm369, %v1843, %v1933
      %v2004 = vsel %vm369, %v1844, %v1935
      %v2005 = vsel %vm369, %v1845, %v1937
      %v2006 = vsel %vm369, %v1846, %v1939
      %v2007 = vsel %vm369, %v1847, %v1941
      %v2008 = vsel %vm369, %v1848, %v1943
      %v2009 = vsel %vm369, %v1849, %v1945
      %vm2042 = vcmask 1040384
      %v2043 = vrot.slane %v1978, 7
      %v2044 = vrot.slane %v1979, 7
      %v2045 = vsel %vm2042, %v2043, %v2044
      %v2046 = vrot.slane %v1980, 7
      %v2047 = vrot.slane %v1981, 7
      %v2048 = vsel %vm2042, %v2046, %v2047
      %v2049 = vrot.slane %v1982, 7
      %v2050 = vrot.slane %v1983, 7
      %v2051 = vsel %vm2042, %v2049, %v2050
      %v2052 = vrot.slane %v1984, 7
      %v2053 = vrot.slane %v1985, 7
      %v2054 = vsel %vm2042, %v2052, %v2053
      %v2055 = vrot.slane %v1986, 7
      %v2056 = vrot.slane %v1987, 7
      %v2057 = vsel %vm2042, %v2055, %v2056
      %v2058 = vrot.slane %v1988, 7
      %v2059 = vrot.slane %v1989, 7
      %v2060 = vsel %vm2042, %v2058, %v2059
      %v2061 = vrot.slane %v1990, 7
      %v2062 = vrot.slane %v1991, 7
      %v2063 = vsel %vm2042, %v2061, %v2062
      %v2064 = vrot.slane %v1992, 7
      %v2065 = vrot.slane %v1993, 7
      %v2066 = vsel %vm2042, %v2064, %v2065
      %v2067 = vrot.slane %v1994, 7
      %v2068 = vrot.slane %v1995, 7
      %v2069 = vsel %vm2042, %v2067, %v2068
      %v2070 = vrot.slane %v1996, 7
      %v2071 = vrot.slane %v1997, 7
      %v2072 = vsel %vm2042, %v2070, %v2071
      %v2073 = vrot.slane %v1998, 7
      %v2074 = vrot.slane %v1999, 7
      %v2075 = vsel %vm2042, %v2073, %v2074
      %v2076 = vrot.slane %v2000, 7
      %v2077 = vrot.slane %v2001, 7
      %v2078 = vsel %vm2042, %v2076, %v2077
      %v2079 = vrot.slane %v2002, 7
      %v2080 = vrot.slane %v2003, 7
      %v2081 = vsel %vm2042, %v2079, %v2080
      %v2082 = vrot.slane %v2004, 7
      %v2083 = vrot.slane %v2005, 7
      %v2084 = vsel %vm2042, %v2082, %v2083
      %v2085 = vrot.slane %v2006, 7
      %v2086 = vrot.slane %v2007, 7
      %v2087 = vsel %vm2042, %v2085, %v2086
      %v2088 = vrot.slane %v2008, 7
      %v2089 = vrot.slane %v2009, 7
      %v2090 = vsel %vm2042, %v2088, %v2089
      %v2139 = vsel %vm2042, 0.0, %v2043
      %v2140 = vsel %vm2042, 0.0, %v2046
      %v2141 = vsel %vm2042, 0.0, %v2049
      %v2142 = vsel %vm2042, 0.0, %v2052
      %v2143 = vsel %vm2042, 0.0, %v2055
      %v2144 = vsel %vm2042, 0.0, %v2058
      %v2145 = vsel %vm2042, 0.0, %v2061
      %v2146 = vsel %vm2042, 0.0, %v2064
      %v2147 = vsel %vm2042, 0.0, %v2067
      %v2148 = vsel %vm2042, 0.0, %v2070
      %v2149 = vsel %vm2042, 0.0, %v2073
      %v2150 = vsel %vm2042, 0.0, %v2076
      %v2151 = vsel %vm2042, 0.0, %v2079
      %v2152 = vsel %vm2042, 0.0, %v2082
      %v2153 = vsel %vm2042, 0.0, %v2085
      %v2154 = vsel %vm2042, 0.0, %v2088
      %v2155 = vsel %vm2042, %v2044, 0.0
      %v2156 = vsel %vm2042, %v2047, 0.0
      %v2157 = vsel %vm2042, %v2050, 0.0
      %v2158 = vsel %vm2042, %v2053, 0.0
      %v2159 = vsel %vm2042, %v2056, 0.0
      %v2160 = vsel %vm2042, %v2059, 0.0
      %v2161 = vsel %vm2042, %v2062, 0.0
      %v2162 = vsel %vm2042, %v2065, 0.0
      %v2163 = vsel %vm2042, %v2068, 0.0
      %v2164 = vsel %vm2042, %v2071, 0.0
      %v2165 = vsel %vm2042, %v2074, 0.0
      %v2166 = vsel %vm2042, %v2077, 0.0
      %v2167 = vsel %vm2042, %v2080, 0.0
      %v2168 = vsel %vm2042, %v2083, 0.0
      %v2169 = vsel %vm2042, %v2086, 0.0
      %v2170 = vsel %vm2042, %v2089, 0.0
      %2171 = vst.msk [vmem:[%s217] sm:$0xff] %vm371, %v2139
      %2172 = vst.msk [vmem:[%s217 + $0x8] sm:$0xff] %vm371, %v2045
      %vm2173 = vcmask 123904
      %2174 = vst.msk [vmem:[%s217 + $0x10] sm:$0x3] %vm2173, %v2155
      %2175 = vst.msk [vmem:[%s217 + $0x18] sm:$0xff] %vm371, %v2140
      %2176 = vst.msk [vmem:[%s217 + $0x20] sm:$0xff] %vm371, %v2048
      %2177 = vst.msk [vmem:[%s217 + $0x28] sm:$0x3] %vm2173, %v2156
      %2178 = vst.msk [vmem:[%s217 + $0x30] sm:$0xff] %vm371, %v2141
      %2179 = vst.msk [vmem:[%s217 + $0x38] sm:$0xff] %vm371, %v2051
      %2180 = vst.msk [vmem:[%s217 + $0x40] sm:$0x3] %vm2173, %v2157
      %2181 = vst.msk [vmem:[%s217 + $0x48] sm:$0xff] %vm371, %v2142
      %2182 = vst.msk [vmem:[%s217 + $0x50] sm:$0xff] %vm371, %v2054
      %2183 = vst.msk [vmem:[%s217 + $0x58] sm:$0x3] %vm2173, %v2158
      %2184 = vst.msk [vmem:[%s217 + $0x60] sm:$0xff] %vm371, %v2143
      %2185 = vst.msk [vmem:[%s217 + $0x68] sm:$0xff] %vm371, %v2057
      %2186 = vst.msk [vmem:[%s217 + $0x70] sm:$0x3] %vm2173, %v2159
      %2187 = vst.msk [vmem:[%s217 + $0x78] sm:$0xff] %vm371, %v2144
      %2188 = vst.msk [vmem:[%s217 + $0x80] sm:$0xff] %vm371, %v2060
      %2189 = vst.msk [vmem:[%s217 + $0x88] sm:$0x3] %vm2173, %v2160
      %2190 = vst.msk [vmem:[%s217 + $0x90] sm:$0xff] %vm371, %v2145
      %2191 = vst.msk [vmem:[%s217 + $0x98] sm:$0xff] %vm371, %v2063
      %2192 = vst.msk [vmem:[%s217 + $0xa0] sm:$0x3] %vm2173, %v2161
      %2193 = vst.msk [vmem:[%s217 + $0xa8] sm:$0xff] %vm371, %v2146
      %2194 = vst.msk [vmem:[%s217 + $0xb0] sm:$0xff] %vm371, %v2066
      %2195 = vst.msk [vmem:[%s217 + $0xb8] sm:$0x3] %vm2173, %v2162
      %2196 = vst.msk [vmem:[%s217 + $0xc0] sm:$0xff] %vm371, %v2147
      %2197 = vst.msk [vmem:[%s217 + $0xc8] sm:$0xff] %vm371, %v2069
      %2198 = vst.msk [vmem:[%s217 + $0xd0] sm:$0x3] %vm2173, %v2163
      %2199 = vst.msk [vmem:[%s217 + $0xd8] sm:$0xff] %vm371, %v2148
      %2200 = vst.msk [vmem:[%s217 + $0xe0] sm:$0xff] %vm371, %v2072
      %2201 = vst.msk [vmem:[%s217 + $0xe8] sm:$0x3] %vm2173, %v2164
      %2202 = vst.msk [vmem:[%s217 + $0xf0] sm:$0xff] %vm371, %v2149
      %2203 = vst.msk [vmem:[%s217 + $0xf8] sm:$0xff] %vm371, %v2075
      %2204 = vst.msk [vmem:[%s217 + $0x100] sm:$0x3] %vm2173, %v2165
      %2205 = vst.msk [vmem:[%s217 + $0x108] sm:$0xff] %vm371, %v2150
      %2206 = vst.msk [vmem:[%s217 + $0x110] sm:$0xff] %vm371, %v2078
      %2207 = vst.msk [vmem:[%s217 + $0x118] sm:$0x3] %vm2173, %v2166
      %2208 = vst.msk [vmem:[%s217 + $0x120] sm:$0xff] %vm371, %v2151
      %2209 = vst.msk [vmem:[%s217 + $0x128] sm:$0xff] %vm371, %v2081
      %2210 = vst.msk [vmem:[%s217 + $0x130] sm:$0x3] %vm2173, %v2167
      %2211 = vst.msk [vmem:[%s217 + $0x138] sm:$0xff] %vm371, %v2152
      %2212 = vst.msk [vmem:[%s217 + $0x140] sm:$0xff] %vm371, %v2084
      %2213 = vst.msk [vmem:[%s217 + $0x148] sm:$0x3] %vm2173, %v2168
      %2214 = vst.msk [vmem:[%s217 + $0x150] sm:$0xff] %vm371, %v2153
      %2215 = vst.msk [vmem:[%s217 + $0x158] sm:$0xff] %vm371, %v2087
      %2216 = vst.msk [vmem:[%s217 + $0x160] sm:$0x3] %vm2173, %v2169
      %2217 = vst.msk [vmem:[%s217 + $0x168] sm:$0xff] %vm371, %v2154
      %2218 = vst.msk [vmem:[%s217 + $0x170] sm:$0xff] %vm371, %v2090
      %2219 = vst.msk [vmem:[%s217 + $0x178] sm:$0x3] %vm2173, %v2170
      %p2220 = scmp.lt.s32.totalorder %s15, 1
      %s2221 = scalar_select %p2220, %s15, 1
      %s2222 = smul.addr %s2221, 48
      %s2223 = smul.addr %s2222, 8
      %s2224 = scalar_lea.vmem %s4, %s2223
      // Predicated region
      $region37: #{tpu_custom_call.1} parent=35 // pred_check
        %p2225 = pneg %p127
      $region38: #{tpu_custom_call.1} parent=35 // pred_check_branch
        %2227 = sbr.rel (%p2225) target = $region40
      $region39: #{tpu_custom_call.1} parent=35 // pred_region
        _
      $region40: #{tpu_custom_call.1} parent=35 // pred_fallthru
        _
    $region36: #{tpu_custom_call.1} parent=5 // pred_fallthru
      _
    %p2228 = scmp.le.s32.totalorder 2, %s10
    // Predicated region
    $region41: #{tpu_custom_call.1} parent=5 // pred_check
      %p2229 = pneg %p2228
    $region42: #{tpu_custom_call.1} parent=5 // pred_check_branch
      %2231 = sbr.rel (%p2229) target = $region44
    $region43: #{tpu_custom_call.1} parent=5 // pred_region
      %s2232 = ssub.s32 %s10, 2
      // Predicated region
      $region45: #{tpu_custom_call.1} parent=43 // pred_check
        %p2233 = pneg %p133
      $region46: #{tpu_custom_call.1} parent=43 // pred_check_branch
        %2235 = sbr.rel (%p2233) target = $region48
      $region47: #{tpu_custom_call.1} parent=43 // pred_region
        %p2236 = scmp.lt.s32.totalorder %s16, 1
        %s2237 = scalar_select %p2236, %s16, 1
        %s2238 = smul.addr %s2237, 48
        %s2239 = smul.addr %s2238, 8
        %s2240 = scalar_lea.vmem %s4, %s2239
      $region48: #{tpu_custom_call.1} parent=43 // pred_fallthru
        _
    $region44: #{tpu_custom_call.1} parent=5 // pred_fallthru
      _
  $region6: #{tpu_custom_call.1} parent=0 // loop_footer
    %s14 = sadd.s32 1, %s10
  $region7: #{tpu_custom_call.1} parent=0 // loop_footer_branch
    %9 = sbr.rel target = $region3
  $region8: #{tpu_custom_call.1} parent=0 // loop_exit
    _

</llo_original>
